<compile_context>
chip_gen: v6e
topology: v6e:2x2x1
jax: 0.10.0
libtpu: 0.0.40
codegen_flags: <defaults>
</compile_context>

<pallas_src>
import jax
import jax.numpy as jnp
from jax.experimental import pallas as pl
from jax.experimental.pallas import tpu as pltpu

EPS_NORM = 1e-12   # F.normalize eps
EPS_BN = 1e-5      # BatchNorm1d eps
NUM = 2            # DCLoss(num=2)


def _l2_normalize_rows(x):
    # F.normalize(x, p=2, dim=1): x / max(||x||_2, eps)
    # == x * rsqrt(max(sum(x^2), eps^2))  (EUP rsqrt + VPU multiply)
    ss = jnp.sum(x * x, axis=1, keepdims=True)
    inv = jax.lax.rsqrt(jnp.maximum(ss, jnp.float32(EPS_NORM * EPS_NORM)))
    return x * inv


def _batchnorm_train(x, gamma, beta):
    # nn.BatchNorm1d in training mode: batch mean / biased batch var
    mean = jnp.mean(x, axis=0, keepdims=True)
    var = jnp.mean((x - mean) * (x - mean), axis=0, keepdims=True)
    return (x - mean) * jax.lax.rsqrt(var + EPS_BN) * gamma + beta


def dcloss_kernel(x_ref, w1_ref, params_ref, w2_ref, out_ref):
    # ---- first F.normalize (f32), then fc1 on bf16 MXU operands ----
    x = x_ref[...]                                          # (B, F) f32
    xn = _l2_normalize_rows(x)
    h = jnp.dot(xn.astype(jnp.bfloat16), w1_ref[...],
                preferred_element_type=jnp.float32)         # (B, H) f32

    # ---- unpack the five small per-feature params from the packed block ----
    params = params_ref[...]                                # (8, H) f32
    gamma1 = params[0:1, :]
    beta1 = params[1:2, :]
    bias2 = params[2:3, :]
    gamma2 = params[3:4, :]
    beta2 = params[4:5, :]

    # ---- fc2: BatchNorm1d(256) -> ReLU -> Linear(256, 256) -> BatchNorm1d(256) ----
    h = _batchnorm_train(h, gamma1, beta1)
    h = jnp.maximum(h, 0.0)
    h = jnp.dot(h.astype(jnp.bfloat16), w2_ref[...],
                preferred_element_type=jnp.float32) + bias2
    h = _batchnorm_train(h, gamma2, beta2)

    # ---- second F.normalize ----
    h = _l2_normalize_rows(h)

    # ---- pairwise group loss ----
    # loss = sum_{i<j} mean(||h[i*num:(i+1)*num] - h[j*num:(j+1)*num]||_2)
    # via sublane rotation + row masking (stays vreg-aligned, no unaligned
    # sublane slices).
    # TODO(synk): the roll shift direction is symmetric for NUM=2; validate
    # against a jnp.roll reference before using NUM > 2.
    B = h.shape[0]
    num = B // NUM
    row_idx = jax.lax.broadcasted_iota(jnp.int32, (B, 1), 0)

    loss = jnp.float32(0.0)
    for i in range(NUM):
        for j in range(NUM):
            if i < j:
                shift = (B - (j - i) * num) % B
                rolled = pltpu.roll(h, shift=shift, axis=0)
                d = h - rolled
                dn = jnp.sqrt(jnp.sum(d * d, axis=1, keepdims=True))  # (B, 1)
                mask = (row_idx >= i * num) & (row_idx < (i + 1) * num)
                loss = loss + jnp.sum(jnp.where(mask, dn, 0.0)) / jnp.float32(num)

    out_ref[0, 0] = loss


def dc_loss(x, w1_t, gamma1, beta1, w2_t, bias2, gamma2, beta2):
    B, F = x.shape
    H = w1_t.shape[1]
    assert B % NUM == 0 and B % 8 == 0

    # bf16 weights: halves the dominant HBM traffic; f32 accumulation on MXU.
    w1_bf = w1_t.astype(jnp.bfloat16)
    w2_bf = w2_t.astype(jnp.bfloat16)

    # Pack the five small (1, H) params into one sublane-aligned (8, H) block.
    params = jnp.concatenate(
        [gamma1.reshape(1, H), beta1.reshape(1, H), bias2.reshape(1, H),
         gamma2.reshape(1, H), beta2.reshape(1, H),
         jnp.zeros((3, H), jnp.float32)], axis=0)

    out = pl.pallas_call(
        dcloss_kernel,
        out_shape=jax.ShapeDtypeStruct((1, 1), jnp.float32),
        grid=(1,),
        in_specs=[
            pl.BlockSpec((B, F), lambda k: (0, 0)),   # x (f32), one DMA
            pl.BlockSpec((F, H), lambda k: (0, 0)),   # w1 (bf16), one DMA
            pl.BlockSpec((8, H), lambda k: (0, 0)),   # packed BN/bias params
            pl.BlockSpec((H, H), lambda k: (0, 0)),   # w2 (bf16)
        ],
        out_specs=pl.BlockSpec(memory_space=pltpu.SMEM),
        compiler_params=pltpu.CompilerParams(
            dimension_semantics=("arbitrary",)),
    )(x, w1_bf, params, w2_bf)
    return out[0, 0]


if __name__ == "__main__":
    key = jax.random.PRNGKey(0)
    k_x, k_w1, k_w2, k_b2 = jax.random.split(key, 4)

    B, F, H = 8, 2048, 256  # batch must be divisible by num=2 (and by 8)

    x = jax.random.normal(k_x, (B, F), dtype=jnp.float32)

    # Deterministic parameter init (synthetic, not a checkpoint load).
    w1_t = jax.random.normal(k_w1, (F, H), dtype=jnp.float32) * 0.02   # Linear(2048,256,bias=False).weight.T
    w2_t = jax.random.normal(k_w2, (H, H), dtype=jnp.float32) * 0.05   # Linear(256,256).weight.T
    bias2 = jax.random.normal(k_b2, (1, H), dtype=jnp.float32) * 0.01
    gamma1 = jnp.ones((1, H), dtype=jnp.float32)   # BatchNorm1d default init
    beta1 = jnp.zeros((1, H), dtype=jnp.float32)
    gamma2 = jnp.ones((1, H), dtype=jnp.float32)
    beta2 = jnp.zeros((1, H), dtype=jnp.float32)

    loss = dc_loss(x, w1_t, gamma1, beta1, w2_t, bias2, gamma2, beta2)
    jax.block_until_ready(loss)
    print("KERNEL_OK")
</pallas_src>

<mosaic_0001>
module attributes {stable_mosaic.version = 11 : i64} {
  func.func @dcloss_kernel(%arg0: i32, %arg1: memref<8x2048xf32, #tpu.memory_space<vmem>>, %arg2: memref<2048x256xbf16, #tpu.memory_space<vmem>>, %arg3: memref<8x256xf32, #tpu.memory_space<vmem>>, %arg4: memref<256x256xbf16, #tpu.memory_space<vmem>>, %arg5: memref<1x1xf32, #tpu.memory_space<smem>>) attributes {dimension_semantics = [#tpu.dimension_semantics<arbitrary>], iteration_bounds = array<i64: 1>, scalar_prefetch = 0 : i64, scratch_operands = 0 : i64, tpu.core_type = #tpu.core_type<tc>, window_params = [{pipeline_mode = #tpu.pipeline_mode<synchronous>, transform_indices = @transform_0, window_bounds = array<i64: 8, 2048>}, {pipeline_mode = #tpu.pipeline_mode<synchronous>, transform_indices = @transform_1, window_bounds = array<i64: 2048, 256>}, {pipeline_mode = #tpu.pipeline_mode<synchronous>, transform_indices = @transform_2, window_bounds = array<i64: 8, 256>}, {pipeline_mode = #tpu.pipeline_mode<synchronous>, transform_indices = @transform_3, window_bounds = array<i64: 256, 256>}, {transform_indices = @transform_4, window_bounds = array<i64: 1, 1>}]} {
    %c0 = arith.constant 0 : index
    %c0_0 = arith.constant 0 : index
    %0 = vector.load %arg1[%c0, %c0_0] : memref<8x2048xf32, #tpu.memory_space<vmem>>, vector<8x2048xf32>
    %1 = arith.mulf %0, %0 : vector<8x2048xf32>
    %cst = arith.constant dense<0.000000e+00> : vector<8xf32>
    %2 = vector.multi_reduction <add>, %1, %cst [1] : vector<8x2048xf32> to vector<8xf32>
    %3 = vector.shape_cast %2 : vector<8xf32> to vector<8x1xf32>
    %cst_1 = arith.constant 1.000000e-24 : f32
    %4 = vector.broadcast %cst_1 : f32 to vector<8x1xf32>
    %5 = arith.maximumf %3, %4 : vector<8x1xf32>
    %6 = math.rsqrt %5 : vector<8x1xf32>
    %7 = vector.broadcast %6 : vector<8x1xf32> to vector<8x2048xf32>
    %8 = arith.mulf %0, %7 : vector<8x2048xf32>
    %9 = arith.truncf %8 : vector<8x2048xf32> to vector<8x2048xbf16>
    %c0_2 = arith.constant 0 : index
    %c0_3 = arith.constant 0 : index
    %10 = vector.load %arg2[%c0_2, %c0_3] : memref<2048x256xbf16, #tpu.memory_space<vmem>>, vector<2048x256xbf16>
    %cst_4 = arith.constant dense<0.000000e+00> : vector<8x256xf32>
    %11 = tpu.matmul %9, %10, %cst_4 {dimension_numbers = #tpu.dot_dimension_numbers<[1], [0], [0], [1], [0, 0, 1, 1], [], []>} : vector<8x2048xbf16>, vector<2048x256xbf16>, vector<8x256xf32> -> vector<8x256xf32>
    %c0_5 = arith.constant 0 : index
    %c0_6 = arith.constant 0 : index
    %12 = vector.load %arg3[%c0_5, %c0_6] : memref<8x256xf32, #tpu.memory_space<vmem>>, vector<8x256xf32>
    %13 = vector.extract_strided_slice %12 {offsets = [0, 0], sizes = [1, 256], strides = [1, 1]} : vector<8x256xf32> to vector<1x256xf32>
    %14 = vector.extract_strided_slice %12 {offsets = [1, 0], sizes = [1, 256], strides = [1, 1]} : vector<8x256xf32> to vector<1x256xf32>
    %15 = vector.extract_strided_slice %12 {offsets = [2, 0], sizes = [1, 256], strides = [1, 1]} : vector<8x256xf32> to vector<1x256xf32>
    %16 = vector.extract_strided_slice %12 {offsets = [3, 0], sizes = [1, 256], strides = [1, 1]} : vector<8x256xf32> to vector<1x256xf32>
    %17 = vector.extract_strided_slice %12 {offsets = [4, 0], sizes = [1, 256], strides = [1, 1]} : vector<8x256xf32> to vector<1x256xf32>
    %cst_7 = arith.constant dense<0.000000e+00> : vector<256xf32>
    %18 = vector.multi_reduction <add>, %11, %cst_7 [0] : vector<8x256xf32> to vector<256xf32>
    %19 = vector.shape_cast %18 : vector<256xf32> to vector<1x256xf32>
    %cst_8 = arith.constant 8.000000e+00 : f32
    %20 = vector.broadcast %cst_8 : f32 to vector<1x256xf32>
    %21 = arith.divf %19, %20 : vector<1x256xf32>
    %22 = vector.broadcast %21 : vector<1x256xf32> to vector<8x256xf32>
    %23 = arith.subf %11, %22 : vector<8x256xf32>
    %24 = vector.broadcast %21 : vector<1x256xf32> to vector<8x256xf32>
    %25 = arith.subf %11, %24 : vector<8x256xf32>
    %26 = arith.mulf %23, %25 : vector<8x256xf32>
    %cst_9 = arith.constant dense<0.000000e+00> : vector<256xf32>
    %27 = vector.multi_reduction <add>, %26, %cst_9 [0] : vector<8x256xf32> to vector<256xf32>
    %28 = vector.shape_cast %27 : vector<256xf32> to vector<1x256xf32>
    %cst_10 = arith.constant 8.000000e+00 : f32
    %29 = vector.broadcast %cst_10 : f32 to vector<1x256xf32>
    %30 = arith.divf %28, %29 : vector<1x256xf32>
    %31 = vector.broadcast %21 : vector<1x256xf32> to vector<8x256xf32>
    %32 = arith.subf %11, %31 : vector<8x256xf32>
    %cst_11 = arith.constant 9.99999974E-6 : f32
    %33 = vector.broadcast %cst_11 : f32 to vector<1x256xf32>
    %34 = arith.addf %30, %33 : vector<1x256xf32>
    %35 = math.rsqrt %34 : vector<1x256xf32>
    %36 = vector.broadcast %35 : vector<1x256xf32> to vector<8x256xf32>
    %37 = arith.mulf %32, %36 : vector<8x256xf32>
    %38 = vector.broadcast %13 : vector<1x256xf32> to vector<8x256xf32>
    %39 = arith.mulf %37, %38 : vector<8x256xf32>
    %40 = vector.broadcast %14 : vector<1x256xf32> to vector<8x256xf32>
    %41 = arith.addf %39, %40 : vector<8x256xf32>
    %cst_12 = arith.constant 0.000000e+00 : f32
    %42 = vector.broadcast %cst_12 : f32 to vector<8x256xf32>
    %43 = arith.maximumf %41, %42 : vector<8x256xf32>
    %44 = arith.truncf %43 : vector<8x256xf32> to vector<8x256xbf16>
    %c0_13 = arith.constant 0 : index
    %c0_14 = arith.constant 0 : index
    %45 = vector.load %arg4[%c0_13, %c0_14] : memref<256x256xbf16, #tpu.memory_space<vmem>>, vector<256x256xbf16>
    %cst_15 = arith.constant dense<0.000000e+00> : vector<8x256xf32>
    %46 = tpu.matmul %44, %45, %cst_15 {dimension_numbers = #tpu.dot_dimension_numbers<[1], [0], [0], [1], [0, 0, 1, 1], [], []>} : vector<8x256xbf16>, vector<256x256xbf16>, vector<8x256xf32> -> vector<8x256xf32>
    %47 = vector.broadcast %15 : vector<1x256xf32> to vector<8x256xf32>
    %48 = arith.addf %46, %47 : vector<8x256xf32>
    %cst_16 = arith.constant dense<0.000000e+00> : vector<256xf32>
    %49 = vector.multi_reduction <add>, %48, %cst_16 [0] : vector<8x256xf32> to vector<256xf32>
    %50 = vector.shape_cast %49 : vector<256xf32> to vector<1x256xf32>
    %cst_17 = arith.constant 8.000000e+00 : f32
    %51 = vector.broadcast %cst_17 : f32 to vector<1x256xf32>
    %52 = arith.divf %50, %51 : vector<1x256xf32>
    %53 = vector.broadcast %52 : vector<1x256xf32> to vector<8x256xf32>
    %54 = arith.subf %48, %53 : vector<8x256xf32>
    %55 = vector.broadcast %52 : vector<1x256xf32> to vector<8x256xf32>
    %56 = arith.subf %48, %55 : vector<8x256xf32>
    %57 = arith.mulf %54, %56 : vector<8x256xf32>
    %cst_18 = arith.constant dense<0.000000e+00> : vector<256xf32>
    %58 = vector.multi_reduction <add>, %57, %cst_18 [0] : vector<8x256xf32> to vector<256xf32>
    %59 = vector.shape_cast %58 : vector<256xf32> to vector<1x256xf32>
    %cst_19 = arith.constant 8.000000e+00 : f32
    %60 = vector.broadcast %cst_19 : f32 to vector<1x256xf32>
    %61 = arith.divf %59, %60 : vector<1x256xf32>
    %62 = vector.broadcast %52 : vector<1x256xf32> to vector<8x256xf32>
    %63 = arith.subf %48, %62 : vector<8x256xf32>
    %cst_20 = arith.constant 9.99999974E-6 : f32
    %64 = vector.broadcast %cst_20 : f32 to vector<1x256xf32>
    %65 = arith.addf %61, %64 : vector<1x256xf32>
    %66 = math.rsqrt %65 : vector<1x256xf32>
    %67 = vector.broadcast %66 : vector<1x256xf32> to vector<8x256xf32>
    %68 = arith.mulf %63, %67 : vector<8x256xf32>
    %69 = vector.broadcast %16 : vector<1x256xf32> to vector<8x256xf32>
    %70 = arith.mulf %68, %69 : vector<8x256xf32>
    %71 = vector.broadcast %17 : vector<1x256xf32> to vector<8x256xf32>
    %72 = arith.addf %70, %71 : vector<8x256xf32>
    %73 = arith.mulf %72, %72 : vector<8x256xf32>
    %cst_21 = arith.constant dense<0.000000e+00> : vector<8xf32>
    %74 = vector.multi_reduction <add>, %73, %cst_21 [1] : vector<8x256xf32> to vector<8xf32>
    %75 = vector.shape_cast %74 : vector<8xf32> to vector<8x1xf32>
    %cst_22 = arith.constant 1.000000e-24 : f32
    %76 = vector.broadcast %cst_22 : f32 to vector<8x1xf32>
    %77 = arith.maximumf %75, %76 : vector<8x1xf32>
    %78 = math.rsqrt %77 : vector<8x1xf32>
    %79 = vector.broadcast %78 : vector<8x1xf32> to vector<8x256xf32>
    %80 = arith.mulf %72, %79 : vector<8x256xf32>
    %81 = tpu.iota {dimensions = array<i32: 0>} : vector<8x1xi32>
    %c4_i32 = arith.constant 4 : i32
    %82 = tpu.dynamic_rotate %80 by %c4_i32 dim 0 : vector<8x256xf32>, i32 -> vector<8x256xf32>
    %83 = arith.subf %80, %82 : vector<8x256xf32>
    %84 = arith.mulf %83, %83 : vector<8x256xf32>
    %cst_23 = arith.constant dense<0.000000e+00> : vector<8xf32>
    %85 = vector.multi_reduction <add>, %84, %cst_23 [1] : vector<8x256xf32> to vector<8xf32>
    %86 = vector.shape_cast %85 : vector<8xf32> to vector<8x1xf32>
    %87 = math.sqrt %86 : vector<8x1xf32>
    %c0_i32 = arith.constant 0 : i32
    %88 = vector.broadcast %c0_i32 : i32 to vector<8x1xi32>
    %89 = arith.cmpi sge, %81, %88 : vector<8x1xi32>
    %c4_i32_24 = arith.constant 4 : i32
    %90 = vector.broadcast %c4_i32_24 : i32 to vector<8x1xi32>
    %91 = arith.cmpi slt, %81, %90 : vector<8x1xi32>
    %92 = arith.andi %89, %91 : vector<8x1xi1>
    %cst_25 = arith.constant 0.000000e+00 : f32
    %93 = vector.broadcast %cst_25 : f32 to vector<8x1xf32>
    %94 = arith.select %92, %87, %93 : vector<8x1xi1>, vector<8x1xf32>
    %95 = vector.shape_cast %94 : vector<8x1xf32> to vector<1x8x1xf32>
    %cst_26 = arith.constant dense<0.000000e+00> : vector<1xf32>
    %96 = vector.multi_reduction <add>, %95, %cst_26 [1, 2] : vector<1x8x1xf32> to vector<1xf32>
    %97 = vector.shape_cast %96 : vector<1xf32> to vector<1x1x1xf32>
    %98 = vector.extract %97[0, 0, 0] : f32 from vector<1x1x1xf32>
    %cst_27 = arith.constant 4.000000e+00 : f32
    %99 = arith.divf %98, %cst_27 : f32
    %cst_28 = arith.constant 0.000000e+00 : f32
    %100 = arith.addf %cst_28, %99 : f32
    %c0_29 = arith.constant 0 : index
    %c0_30 = arith.constant 0 : index
    %101 = memref.load %arg5[%c0_29, %c0_30] : memref<1x1xf32, #tpu.memory_space<smem>>
    memref.store %100, %arg5[%c0_29, %c0_30] : memref<1x1xf32, #tpu.memory_space<smem>>
    return
  }
  func.func @transform_0(%arg0: i32) -> (i32, i32) {
    %c0_i32 = arith.constant 0 : i32
    %c0_i32_0 = arith.constant 0 : i32
    %c0_i32_1 = arith.constant 0 : i32
    return %c0_i32, %c0_i32_0 : i32, i32
  }
  func.func @transform_1(%arg0: i32) -> (i32, i32) {
    %c0_i32 = arith.constant 0 : i32
    %c0_i32_0 = arith.constant 0 : i32
    %c0_i32_1 = arith.constant 0 : i32
    return %c0_i32, %c0_i32_0 : i32, i32
  }
  func.func @transform_2(%arg0: i32) -> (i32, i32) {
    %c0_i32 = arith.constant 0 : i32
    %c0_i32_0 = arith.constant 0 : i32
    %c0_i32_1 = arith.constant 0 : i32
    return %c0_i32, %c0_i32_0 : i32, i32
  }
  func.func @transform_3(%arg0: i32) -> (i32, i32) {
    %c0_i32 = arith.constant 0 : i32
    %c0_i32_0 = arith.constant 0 : i32
    %c0_i32_1 = arith.constant 0 : i32
    return %c0_i32, %c0_i32_0 : i32, i32
  }
  func.func @transform_4(%arg0: i32) -> (i32, i32) {
    %c0_i32 = arith.constant 0 : i32
    %c0_i32_0 = arith.constant 0 : i32
    %c0_i32_1 = arith.constant 0 : i32
    return %c0_i32, %c0_i32_0 : i32, i32
  }
}

</mosaic_0001>

<llo_original>
// kernel: tpu_custom_call.1
$region0: #{tpu_custom_call.1}
  #allocation0 [shape = 'u32[]', space=smem, size = 0x4, offset = 0x4, fixed_abs, tag = 'smem constant byte address 0x4 - core index']
  #allocation1 [shape = 'u32[144,128]{1,0:T(1,128)}', space=vmem, size = 0x12000, scoped, tag = 'internal scratch']
  %s0 = inlined_call_operand.hbm [shape: f32[8,2048], index: 0, kind: input, shape index: {}]
  %s1 = inlined_call_operand.hbm [shape: bf16[2048,256], index: 1, kind: input, shape index: {}]
  %s2 = inlined_call_operand.hbm [shape: f32[8,256], index: 2, kind: input, shape index: {}]
  %s3 = inlined_call_operand.hbm [shape: bf16[256,256], index: 3, kind: input, shape index: {}]
  %s4 = inlined_call_operand.hbm [shape: f32[1,1], index: 4, kind: output, shape index: {}]
  %s5 = sld [smem:[#allocation0]]
  $region42: #{tpu_custom_call.1} parent=0
    _
  %s7 = ssub.s32 1, %s5
  %s8 = scalar_select 0, %s7, %s5
  $region1: #{tpu_custom_call.1} parent=0
    #allocation2 [shape = 'u8[65536]{0}', space=vmem, size = 0x10000, scoped, tag = 'input window, operand 0, single buffered']
    #allocation3 [shape = 's32[1]{0}', space=sflag, size = 0x4, scoped, tag = 'scoped memory for tpu_custom_call.1']
    #allocation4 [shape = 's32[1]{0}', space=sflag, size = 0x4, scoped, tag = 'scoped memory for tpu_custom_call.1']
    #allocation5 [shape = 'u8[1048576]{0}', space=vmem, size = 0x100000, scoped, tag = 'input window, operand 1, single buffered']
    #allocation6 [shape = 's32[1]{0}', space=sflag, size = 0x4, scoped, tag = 'scoped memory for tpu_custom_call.1']
    #allocation7 [shape = 'u8[8192]{0}', space=vmem, size = 0x2000, scoped, tag = 'input window, operand 2, single buffered']
    #allocation8 [shape = 'u8[131072]{0}', space=vmem, size = 0x20000, scoped, tag = 'input window, operand 3, single buffered']
    #allocation9 [shape = 's32[1]{0}', space=sflag, size = 0x4, scoped, tag = 'scoped memory for tpu_custom_call.1']
    #allocation10 [shape = 'u8[512]{0}', space=smem, size = 0x200, scoped, tag = 'output window, operand 0, single buffered']
    %9 = vsyncpa [#allocation3], 0
    %10 = vsyncpa [#allocation6], 0
    %11 = vsyncpa [#allocation9], 0
    %12 = vsyncpa [#allocation4], 0
    // Predicated region
    $region2: #{tpu_custom_call.1} parent=1 // pred_check
      _
    $region3: #{tpu_custom_call.1} parent=1 // pred_check_branch
      %14 = sbr.rel (0) target = $region5
    $region4: #{tpu_custom_call.1} parent=1 // pred_region
      %s16 = ssub.s32 2048, 2048
      %17 = vsyncadd [#allocation3], %s16
      %s19 = sshll.u32 [#allocation2], 4
      %s20 = int_to_ptr.vmem [resolvable:$true] %s19
      %22 = dma.hbm_to_vmem [thread:$0]  %s0, 2048, %s20, [#allocation3]
    $region5: #{tpu_custom_call.1} parent=1 // pred_fallthru
      _
    // Predicated region
    $region6: #{tpu_custom_call.1} parent=1 // pred_check
      _
    $region7: #{tpu_custom_call.1} parent=1 // pred_check_branch
      %24 = sbr.rel (0) target = $region9
    $region8: #{tpu_custom_call.1} parent=1 // pred_region
      %s26 = ssub.s32 32768, 32768
      %27 = vsyncadd [#allocation6], %s26
      %s28 = sshll.u32 [#allocation5], 4
      %s29 = int_to_ptr.vmem [resolvable:$true] %s28
      %34 = dma.hbm_to_vmem [thread:$0]  %s1, 32768, %s29, [#allocation6], 128, 128, 8
    $region9: #{tpu_custom_call.1} parent=1 // pred_fallthru
      _
    // Predicated region
    $region10: #{tpu_custom_call.1} parent=1 // pred_check
      _
    $region11: #{tpu_custom_call.1} parent=1 // pred_check_branch
      %36 = sbr.rel (0) target = $region13
    $region12: #{tpu_custom_call.1} parent=1 // pred_region
      %s38 = ssub.s32 256, 256
      %39 = vsyncadd [#allocation6], %s38
      %s41 = sshll.u32 [#allocation7], 4
      %s42 = int_to_ptr.vmem [resolvable:$true] %s41
      %44 = dma.hbm_to_vmem [thread:$0]  %s2, 256, %s42, [#allocation6]
    $region13: #{tpu_custom_call.1} parent=1 // pred_fallthru
      _
    // Predicated region
    $region14: #{tpu_custom_call.1} parent=1 // pred_check
      _
    $region15: #{tpu_custom_call.1} parent=1 // pred_check_branch
      %46 = sbr.rel (0) target = $region17
    $region16: #{tpu_custom_call.1} parent=1 // pred_region
      %s48 = ssub.s32 4096, 4096
      %49 = vsyncadd [#allocation9], %s48
      %s50 = sshll.u32 [#allocation8], 4
      %s51 = int_to_ptr.vmem [resolvable:$true] %s50
      %56 = dma.hbm_to_vmem [thread:$0]  %s3, 4096, %s51, [#allocation9], 128, 128, 8
    $region17: #{tpu_custom_call.1} parent=1 // pred_fallthru
      _
    // Predicated region
    $region18: #{tpu_custom_call.1} parent=1 // pred_check
      _
    $region19: #{tpu_custom_call.1} parent=1 // pred_check_branch
      %58 = sbr.rel (0) target = $region21
    $region20: #{tpu_custom_call.1} parent=1 // pred_region
      %59 = dma.done [#allocation3], 2048
    $region21: #{tpu_custom_call.1} parent=1 // pred_fallthru
      _
    // Predicated region
    $region22: #{tpu_custom_call.1} parent=1 // pred_check
      _
    $region23: #{tpu_custom_call.1} parent=1 // pred_check_branch
      %61 = sbr.rel (0) target = $region25
    $region24: #{tpu_custom_call.1} parent=1 // pred_region
      %62 = dma.done [#allocation6], 32768
    $region25: #{tpu_custom_call.1} parent=1 // pred_fallthru
      _
    // Predicated region
    $region26: #{tpu_custom_call.1} parent=1 // pred_check
      _
    $region27: #{tpu_custom_call.1} parent=1 // pred_check_branch
      %64 = sbr.rel (0) target = $region29
    $region28: #{tpu_custom_call.1} parent=1 // pred_region
      %65 = dma.done [#allocation6], 256
    $region29: #{tpu_custom_call.1} parent=1 // pred_fallthru
      _
    // Predicated region
    $region30: #{tpu_custom_call.1} parent=1 // pred_check
      _
    $region31: #{tpu_custom_call.1} parent=1 // pred_check_branch
      %67 = sbr.rel (0) target = $region33
    $region32: #{tpu_custom_call.1} parent=1 // pred_region
      %68 = dma.done [#allocation9], 4096
    $region33: #{tpu_custom_call.1} parent=1 // pred_fallthru
      _
    %v69 = vld [vmem:[#allocation2] sm:$0xff]
    %v70 = vld [vmem:[#allocation2 + $0x8] sm:$0xff]
    %v71 = vld [vmem:[#allocation2 + $0x10] sm:$0xff]
    %v72 = vld [vmem:[#allocation2 + $0x18] sm:$0xff]
    %v73 = vld [vmem:[#allocation2 + $0x20] sm:$0xff]
    %v74 = vld [vmem:[#allocation2 + $0x28] sm:$0xff]
    %v75 = vld [vmem:[#allocation2 + $0x30] sm:$0xff]
    %v76 = vld [vmem:[#allocation2 + $0x38] sm:$0xff]
    %v77 = vld [vmem:[#allocation2 + $0x40] sm:$0xff]
    %v78 = vld [vmem:[#allocation2 + $0x48] sm:$0xff]
    %v79 = vld [vmem:[#allocation2 + $0x50] sm:$0xff]
    %v80 = vld [vmem:[#allocation2 + $0x58] sm:$0xff]
    %v81 = vld [vmem:[#allocation2 + $0x60] sm:$0xff]
    %v82 = vld [vmem:[#allocation2 + $0x68] sm:$0xff]
    %v83 = vld [vmem:[#allocation2 + $0x70] sm:$0xff]
    %v84 = vld [vmem:[#allocation2 + $0x78] sm:$0xff]
    %v85 = vmul.f32 %v69, %v69
    %v86 = vmul.f32 %v70, %v70
    %v87 = vmul.f32 %v71, %v71
    %v88 = vmul.f32 %v72, %v72
    %v89 = vmul.f32 %v73, %v73
    %v90 = vmul.f32 %v74, %v74
    %v91 = vmul.f32 %v75, %v75
    %v92 = vmul.f32 %v76, %v76
    %v93 = vmul.f32 %v77, %v77
    %v94 = vmul.f32 %v78, %v78
    %v95 = vmul.f32 %v79, %v79
    %v96 = vmul.f32 %v80, %v80
    %v97 = vmul.f32 %v81, %v81
    %v98 = vmul.f32 %v82, %v82
    %v99 = vmul.f32 %v83, %v83
    %v100 = vmul.f32 %v84, %v84
    %v101 = vadd.f32 %v85, %v86
    %v102 = vadd.f32 %v101, %v87
    %v103 = vadd.f32 %v102, %v88
    %v104 = vadd.f32 %v103, %v89
    %v105 = vadd.f32 %v104, %v90
    %v106 = vadd.f32 %v105, %v91
    %v107 = vadd.f32 %v106, %v92
    %v108 = vadd.f32 %v107, %v93
    %v109 = vadd.f32 %v108, %v94
    %v110 = vadd.f32 %v109, %v95
    %v111 = vadd.f32 %v110, %v96
    %v112 = vadd.f32 %v111, %v97
    %v113 = vadd.f32 %v112, %v98
    %v114 = vadd.f32 %v113, %v99
    %v115 = vadd.f32 %v114, %v100
    %116 = vadd.xlane.f32.xlu0 %v115
    %v117 = vpop.xlane.xlu0 %116
    %v118 = vmax.f32 %v117, 1e-24
    %v119 = vrsqrt.pop %v118
    %v120 = vmul.f32 %v69, %v119
    %v121 = vmul.f32 %v70, %v119
    %v122 = vmul.f32 %v71, %v119
    %v123 = vmul.f32 %v72, %v119
    %v124 = vmul.f32 %v73, %v119
    %v125 = vmul.f32 %v74, %v119
    %v126 = vmul.f32 %v75, %v119
    %v127 = vmul.f32 %v76, %v119
    %v128 = vmul.f32 %v77, %v119
    %v129 = vmul.f32 %v78, %v119
    %v130 = vmul.f32 %v79, %v119
    %v131 = vmul.f32 %v80, %v119
    %v132 = vmul.f32 %v81, %v119
    %v133 = vmul.f32 %v82, %v119
    %v134 = vmul.f32 %v83, %v119
    %v135 = vmul.f32 %v84, %v119
    %v136 = vpack.c.bf16 %v120, %v120
    %v137 = vpack.c.bf16 %v121, %v121
    %v138 = vpack.c.bf16 %v122, %v122
    %v139 = vpack.c.bf16 %v123, %v123
    %v140 = vpack.c.bf16 %v124, %v124
    %v141 = vpack.c.bf16 %v125, %v125
    %v142 = vpack.c.bf16 %v126, %v126
    %v143 = vpack.c.bf16 %v127, %v127
    %v144 = vpack.c.bf16 %v128, %v128
    %v145 = vpack.c.bf16 %v129, %v129
    %v146 = vpack.c.bf16 %v130, %v130
    %v147 = vpack.c.bf16 %v131, %v131
    %v148 = vpack.c.bf16 %v132, %v132
    %v149 = vpack.c.bf16 %v133, %v133
    %v150 = vpack.c.bf16 %v134, %v134
    %v151 = vpack.c.bf16 %v135, %v135
    %v152 = vld [vmem:[#allocation5] sm:$0xff]
    %v153 = vld [vmem:[#allocation5 + $0x8] sm:$0xff]
    %v154 = vld [vmem:[#allocation5 + $0x10] sm:$0xff]
    %v155 = vld [vmem:[#allocation5 + $0x18] sm:$0xff]
    %v156 = vld [vmem:[#allocation5 + $0x20] sm:$0xff]
    %v157 = vld [vmem:[#allocation5 + $0x28] sm:$0xff]
    %v158 = vld [vmem:[#allocation5 + $0x30] sm:$0xff]
    %v159 = vld [vmem:[#allocation5 + $0x38] sm:$0xff]
    %v160 = vld [vmem:[#allocation5 + $0x40] sm:$0xff]
    %v161 = vld [vmem:[#allocation5 + $0x48] sm:$0xff]
    %v162 = vld [vmem:[#allocation5 + $0x50] sm:$0xff]
    %v163 = vld [vmem:[#allocation5 + $0x58] sm:$0xff]
    %v164 = vld [vmem:[#allocation5 + $0x60] sm:$0xff]
    %v165 = vld [vmem:[#allocation5 + $0x68] sm:$0xff]
    %v166 = vld [vmem:[#allocation5 + $0x70] sm:$0xff]
    %v167 = vld [vmem:[#allocation5 + $0x78] sm:$0xff]
    %v168 = vld [vmem:[#allocation5 + $0x80] sm:$0xff]
    %v169 = vld [vmem:[#allocation5 + $0x88] sm:$0xff]
    %v170 = vld [vmem:[#allocation5 + $0x90] sm:$0xff]
    %v171 = vld [vmem:[#allocation5 + $0x98] sm:$0xff]
    %v172 = vld [vmem:[#allocation5 + $0xa0] sm:$0xff]
    %v173 = vld [vmem:[#allocation5 + $0xa8] sm:$0xff]
    %v174 = vld [vmem:[#allocation5 + $0xb0] sm:$0xff]
    %v175 = vld [vmem:[#allocation5 + $0xb8] sm:$0xff]
    %v176 = vld [vmem:[#allocation5 + $0xc0] sm:$0xff]
    %v177 = vld [vmem:[#allocation5 + $0xc8] sm:$0xff]
    %v178 = vld [vmem:[#allocation5 + $0xd0] sm:$0xff]
    %v179 = vld [vmem:[#allocation5 + $0xd8] sm:$0xff]
    %v180 = vld [vmem:[#allocation5 + $0xe0] sm:$0xff]
    %v181 = vld [vmem:[#allocation5 + $0xe8] sm:$0xff]
    %v182 = vld [vmem:[#allocation5 + $0xf0] sm:$0xff]
    %v183 = vld [vmem:[#allocation5 + $0xf8] sm:$0xff]
    %v184 = vld [vmem:[#allocation5 + $0x100] sm:$0xff]
    %v185 = vld [vmem:[#allocation5 + $0x108] sm:$0xff]
    %v186 = vld [vmem:[#allocation5 + $0x110] sm:$0xff]
    %v187 = vld [vmem:[#allocation5 + $0x118] sm:$0xff]
    %v188 = vld [vmem:[#allocation5 + $0x120] sm:$0xff]
    %v189 = vld [vmem:[#allocation5 + $0x128] sm:$0xff]
    %v190 = vld [vmem:[#allocation5 + $0x130] sm:$0xff]
    %v191 = vld [vmem:[#allocation5 + $0x138] sm:$0xff]
    %v192 = vld [vmem:[#allocation5 + $0x140] sm:$0xff]
    %v193 = vld [vmem:[#allocation5 + $0x148] sm:$0xff]
    %v194 = vld [vmem:[#allocation5 + $0x150] sm:$0xff]
    %v195 = vld [vmem:[#allocation5 + $0x158] sm:$0xff]
    %v196 = vld [vmem:[#allocation5 + $0x160] sm:$0xff]
    %v197 = vld [vmem:[#allocation5 + $0x168] sm:$0xff]
    %v198 = vld [vmem:[#allocation5 + $0x170] sm:$0xff]
    %v199 = vld [vmem:[#allocation5 + $0x178] sm:$0xff]
    %v200 = vld [vmem:[#allocation5 + $0x180] sm:$0xff]
    %v201 = vld [vmem:[#allocation5 + $0x188] sm:$0xff]
    %v202 = vld [vmem:[#allocation5 + $0x190] sm:$0xff]
    %v203 = vld [vmem:[#allocation5 + $0x198] sm:$0xff]
    %v204 = vld [vmem:[#allocation5 + $0x1a0] sm:$0xff]
    %v205 = vld [vmem:[#allocation5 + $0x1a8] sm:$0xff]
    %v206 = vld [vmem:[#allocation5 + $0x1b0] sm:$0xff]
    %v207 = vld [vmem:[#allocation5 + $0x1b8] sm:$0xff]
    %v208 = vld [vmem:[#allocation5 + $0x1c0] sm:$0xff]
    %v209 = vld [vmem:[#allocation5 + $0x1c8] sm:$0xff]
    %v210 = vld [vmem:[#allocation5 + $0x1d0] sm:$0xff]
    %v211 = vld [vmem:[#allocation5 + $0x1d8] sm:$0xff]
    %v212 = vld [vmem:[#allocation5 + $0x1e0] sm:$0xff]
    %v213 = vld [vmem:[#allocation5 + $0x1e8] sm:$0xff]
    %v214 = vld [vmem:[#allocation5 + $0x1f0] sm:$0xff]
    %v215 = vld [vmem:[#allocation5 + $0x1f8] sm:$0xff]
    %v216 = vld [vmem:[#allocation5 + $0x200] sm:$0xff]
    %v217 = vld [vmem:[#allocation5 + $0x208] sm:$0xff]
    %v218 = vld [vmem:[#allocation5 + $0x210] sm:$0xff]
    %v219 = vld [vmem:[#allocation5 + $0x218] sm:$0xff]
    %v220 = vld [vmem:[#allocation5 + $0x220] sm:$0xff]
    %v221 = vld [vmem:[#allocation5 + $0x228] sm:$0xff]
    %v222 = vld [vmem:[#allocation5 + $0x230] sm:$0xff]
    %v223 = vld [vmem:[#allocation5 + $0x238] sm:$0xff]
    %v224 = vld [vmem:[#allocation5 + $0x240] sm:$0xff]
    %v225 = vld [vmem:[#allocation5 + $0x248] sm:$0xff]
    %v226 = vld [vmem:[#allocation5 + $0x250] sm:$0xff]
    %v227 = vld [vmem:[#allocation5 + $0x258] sm:$0xff]
    %v228 = vld [vmem:[#allocation5 + $0x260] sm:$0xff]
    %v229 = vld [vmem:[#allocation5 + $0x268] sm:$0xff]
    %v230 = vld [vmem:[#allocation5 + $0x270] sm:$0xff]
    %v231 = vld [vmem:[#allocation5 + $0x278] sm:$0xff]
    %v232 = vld [vmem:[#allocation5 + $0x280] sm:$0xff]
    %v233 = vld [vmem:[#allocation5 + $0x288] sm:$0xff]
    %v234 = vld [vmem:[#allocation5 + $0x290] sm:$0xff]
    %v235 = vld [vmem:[#allocation5 + $0x298] sm:$0xff]
    %v236 = vld [vmem:[#allocation5 + $0x2a0] sm:$0xff]
    %v237 = vld [vmem:[#allocation5 + $0x2a8] sm:$0xff]
    %v238 = vld [vmem:[#allocation5 + $0x2b0] sm:$0xff]
    %v239 = vld [vmem:[#allocation5 + $0x2b8] sm:$0xff]
    %v240 = vld [vmem:[#allocation5 + $0x2c0] sm:$0xff]
    %v241 = vld [vmem:[#allocation5 + $0x2c8] sm:$0xff]
    %v242 = vld [vmem:[#allocation5 + $0x2d0] sm:$0xff]
    %v243 = vld [vmem:[#allocation5 + $0x2d8] sm:$0xff]
    %v244 = vld [vmem:[#allocation5 + $0x2e0] sm:$0xff]
    %v245 = vld [vmem:[#allocation5 + $0x2e8] sm:$0xff]
    %v246 = vld [vmem:[#allocation5 + $0x2f0] sm:$0xff]
    %v247 = vld [vmem:[#allocation5 + $0x2f8] sm:$0xff]
    %v248 = vld [vmem:[#allocation5 + $0x300] sm:$0xff]
    %v249 = vld [vmem:[#allocation5 + $0x308] sm:$0xff]
    %v250 = vld [vmem:[#allocation5 + $0x310] sm:$0xff]
    %v251 = vld [vmem:[#allocation5 + $0x318] sm:$0xff]
    %v252 = vld [vmem:[#allocation5 + $0x320] sm:$0xff]
    %v253 = vld [vmem:[#allocation5 + $0x328] sm:$0xff]
    %v254 = vld [vmem:[#allocation5 + $0x330] sm:$0xff]
    %v255 = vld [vmem:[#allocation5 + $0x338] sm:$0xff]
    %v256 = vld [vmem:[#allocation5 + $0x340] sm:$0xff]
    %v257 = vld [vmem:[#allocation5 + $0x348] sm:$0xff]
    %v258 = vld [vmem:[#allocation5 + $0x350] sm:$0xff]
    %v259 = vld [vmem:[#allocation5 + $0x358] sm:$0xff]
    %v260 = vld [vmem:[#allocation5 + $0x360] sm:$0xff]
    %v261 = vld [vmem:[#allocation5 + $0x368] sm:$0xff]
    %v262 = vld [vmem:[#allocation5 + $0x370] sm:$0xff]
    %v263 = vld [vmem:[#allocation5 + $0x378] sm:$0xff]
    %v264 = vld [vmem:[#allocation5 + $0x380] sm:$0xff]
    %v265 = vld [vmem:[#allocation5 + $0x388] sm:$0xff]
    %v266 = vld [vmem:[#allocation5 + $0x390] sm:$0xff]
    %v267 = vld [vmem:[#allocation5 + $0x398] sm:$0xff]
    %v268 = vld [vmem:[#allocation5 + $0x3a0] sm:$0xff]
    %v269 = vld [vmem:[#allocation5 + $0x3a8] sm:$0xff]
    %v270 = vld [vmem:[#allocation5 + $0x3b0] sm:$0xff]
    %v271 = vld [vmem:[#allocation5 + $0x3b8] sm:$0xff]
    %v272 = vld [vmem:[#allocation5 + $0x3c0] sm:$0xff]
    %v273 = vld [vmem:[#allocation5 + $0x3c8] sm:$0xff]
    %v274 = vld [vmem:[#allocation5 + $0x3d0] sm:$0xff]
    %v275 = vld [vmem:[#allocation5 + $0x3d8] sm:$0xff]
    %v276 = vld [vmem:[#allocation5 + $0x3e0] sm:$0xff]
    %v277 = vld [vmem:[#allocation5 + $0x3e8] sm:$0xff]
    %v278 = vld [vmem:[#allocation5 + $0x3f0] sm:$0xff]
    %v279 = vld [vmem:[#allocation5 + $0x3f8] sm:$0xff]
    %v280 = vld [vmem:[#allocation5 + $0x400] sm:$0xff]
    %v281 = vld [vmem:[#allocation5 + $0x408] sm:$0xff]
    %v282 = vld [vmem:[#allocation5 + $0x410] sm:$0xff]
    %v283 = vld [vmem:[#allocation5 + $0x418] sm:$0xff]
    %v284 = vld [vmem:[#allocation5 + $0x420] sm:$0xff]
    %v285 = vld [vmem:[#allocation5 + $0x428] sm:$0xff]
    %v286 = vld [vmem:[#allocation5 + $0x430] sm:$0xff]
    %v287 = vld [vmem:[#allocation5 + $0x438] sm:$0xff]
    %v288 = vld [vmem:[#allocation5 + $0x440] sm:$0xff]
    %v289 = vld [vmem:[#allocation5 + $0x448] sm:$0xff]
    %v290 = vld [vmem:[#allocation5 + $0x450] sm:$0xff]
    %v291 = vld [vmem:[#allocation5 + $0x458] sm:$0xff]
    %v292 = vld [vmem:[#allocation5 + $0x460] sm:$0xff]
    %v293 = vld [vmem:[#allocation5 + $0x468] sm:$0xff]
    %v294 = vld [vmem:[#allocation5 + $0x470] sm:$0xff]
    %v295 = vld [vmem:[#allocation5 + $0x478] sm:$0xff]
    %v296 = vld [vmem:[#allocation5 + $0x480] sm:$0xff]
    %v297 = vld [vmem:[#allocation5 + $0x488] sm:$0xff]
    %v298 = vld [vmem:[#allocation5 + $0x490] sm:$0xff]
    %v299 = vld [vmem:[#allocation5 + $0x498] sm:$0xff]
    %v300 = vld [vmem:[#allocation5 + $0x4a0] sm:$0xff]
    %v301 = vld [vmem:[#allocation5 + $0x4a8] sm:$0xff]
    %v302 = vld [vmem:[#allocation5 + $0x4b0] sm:$0xff]
    %v303 = vld [vmem:[#allocation5 + $0x4b8] sm:$0xff]
    %v304 = vld [vmem:[#allocation5 + $0x4c0] sm:$0xff]
    %v305 = vld [vmem:[#allocation5 + $0x4c8] sm:$0xff]
    %v306 = vld [vmem:[#allocation5 + $0x4d0] sm:$0xff]
    %v307 = vld [vmem:[#allocation5 + $0x4d8] sm:$0xff]
    %v308 = vld [vmem:[#allocation5 + $0x4e0] sm:$0xff]
    %v309 = vld [vmem:[#allocation5 + $0x4e8] sm:$0xff]
    %v310 = vld [vmem:[#allocation5 + $0x4f0] sm:$0xff]
    %v311 = vld [vmem:[#allocation5 + $0x4f8] sm:$0xff]
    %v312 = vld [vmem:[#allocation5 + $0x500] sm:$0xff]
    %v313 = vld [vmem:[#allocation5 + $0x508] sm:$0xff]
    %v314 = vld [vmem:[#allocation5 + $0x510] sm:$0xff]
    %v315 = vld [vmem:[#allocation5 + $0x518] sm:$0xff]
    %v316 = vld [vmem:[#allocation5 + $0x520] sm:$0xff]
    %v317 = vld [vmem:[#allocation5 + $0x528] sm:$0xff]
    %v318 = vld [vmem:[#allocation5 + $0x530] sm:$0xff]
    %v319 = vld [vmem:[#allocation5 + $0x538] sm:$0xff]
    %v320 = vld [vmem:[#allocation5 + $0x540] sm:$0xff]
    %v321 = vld [vmem:[#allocation5 + $0x548] sm:$0xff]
    %v322 = vld [vmem:[#allocation5 + $0x550] sm:$0xff]
    %v323 = vld [vmem:[#allocation5 + $0x558] sm:$0xff]
    %v324 = vld [vmem:[#allocation5 + $0x560] sm:$0xff]
    %v325 = vld [vmem:[#allocation5 + $0x568] sm:$0xff]
    %v326 = vld [vmem:[#allocation5 + $0x570] sm:$0xff]
    %v327 = vld [vmem:[#allocation5 + $0x578] sm:$0xff]
    %v328 = vld [vmem:[#allocation5 + $0x580] sm:$0xff]
    %v329 = vld [vmem:[#allocation5 + $0x588] sm:$0xff]
    %v330 = vld [vmem:[#allocation5 + $0x590] sm:$0xff]
    %v331 = vld [vmem:[#allocation5 + $0x598] sm:$0xff]
    %v332 = vld [vmem:[#allocation5 + $0x5a0] sm:$0xff]
    %v333 = vld [vmem:[#allocation5 + $0x5a8] sm:$0xff]
    %v334 = vld [vmem:[#allocation5 + $0x5b0] sm:$0xff]
    %v335 = vld [vmem:[#allocation5 + $0x5b8] sm:$0xff]
    %v336 = vld [vmem:[#allocation5 + $0x5c0] sm:$0xff]
    %v337 = vld [vmem:[#allocation5 + $0x5c8] sm:$0xff]
    %v338 = vld [vmem:[#allocation5 + $0x5d0] sm:$0xff]
    %v339 = vld [vmem:[#allocation5 + $0x5d8] sm:$0xff]
    %v340 = vld [vmem:[#allocation5 + $0x5e0] sm:$0xff]
    %v341 = vld [vmem:[#allocation5 + $0x5e8] sm:$0xff]
    %v342 = vld [vmem:[#allocation5 + $0x5f0] sm:$0xff]
    %v343 = vld [vmem:[#allocation5 + $0x5f8] sm:$0xff]
    %v344 = vld [vmem:[#allocation5 + $0x600] sm:$0xff]
    %v345 = vld [vmem:[#allocation5 + $0x608] sm:$0xff]
    %v346 = vld [vmem:[#allocation5 + $0x610] sm:$0xff]
    %v347 = vld [vmem:[#allocation5 + $0x618] sm:$0xff]
    %v348 = vld [vmem:[#allocation5 + $0x620] sm:$0xff]
    %v349 = vld [vmem:[#allocation5 + $0x628] sm:$0xff]
    %v350 = vld [vmem:[#allocation5 + $0x630] sm:$0xff]
    %v351 = vld [vmem:[#allocation5 + $0x638] sm:$0xff]
    %v352 = vld [vmem:[#allocation5 + $0x640] sm:$0xff]
    %v353 = vld [vmem:[#allocation5 + $0x648] sm:$0xff]
    %v354 = vld [vmem:[#allocation5 + $0x650] sm:$0xff]
    %v355 = vld [vmem:[#allocation5 + $0x658] sm:$0xff]
    %v356 = vld [vmem:[#allocation5 + $0x660] sm:$0xff]
    %v357 = vld [vmem:[#allocation5 + $0x668] sm:$0xff]
    %v358 = vld [vmem:[#allocation5 + $0x670] sm:$0xff]
    %v359 = vld [vmem:[#allocation5 + $0x678] sm:$0xff]
    %v360 = vld [vmem:[#allocation5 + $0x680] sm:$0xff]
    %v361 = vld [vmem:[#allocation5 + $0x688] sm:$0xff]
    %v362 = vld [vmem:[#allocation5 + $0x690] sm:$0xff]
    %v363 = vld [vmem:[#allocation5 + $0x698] sm:$0xff]
    %v364 = vld [vmem:[#allocation5 + $0x6a0] sm:$0xff]
    %v365 = vld [vmem:[#allocation5 + $0x6a8] sm:$0xff]
    %v366 = vld [vmem:[#allocation5 + $0x6b0] sm:$0xff]
    %v367 = vld [vmem:[#allocation5 + $0x6b8] sm:$0xff]
    %v368 = vld [vmem:[#allocation5 + $0x6c0] sm:$0xff]
    %v369 = vld [vmem:[#allocation5 + $0x6c8] sm:$0xff]
    %v370 = vld [vmem:[#allocation5 + $0x6d0] sm:$0xff]
    %v371 = vld [vmem:[#allocation5 + $0x6d8] sm:$0xff]
    %v372 = vld [vmem:[#allocation5 + $0x6e0] sm:$0xff]
    %v373 = vld [vmem:[#allocation5 + $0x6e8] sm:$0xff]
    %v374 = vld [vmem:[#allocation5 + $0x6f0] sm:$0xff]
    %v375 = vld [vmem:[#allocation5 + $0x6f8] sm:$0xff]
    %v376 = vld [vmem:[#allocation5 + $0x700] sm:$0xff]
    %v377 = vld [vmem:[#allocation5 + $0x708] sm:$0xff]
    %v378 = vld [vmem:[#allocation5 + $0x710] sm:$0xff]
    %v379 = vld [vmem:[#allocation5 + $0x718] sm:$0xff]
    %v380 = vld [vmem:[#allocation5 + $0x720] sm:$0xff]
    %v381 = vld [vmem:[#allocation5 + $0x728] sm:$0xff]
    %v382 = vld [vmem:[#allocation5 + $0x730] sm:$0xff]
    %v383 = vld [vmem:[#allocation5 + $0x738] sm:$0xff]
    %v384 = vld [vmem:[#allocation5 + $0x740] sm:$0xff]
    %v385 = vld [vmem:[#allocation5 + $0x748] sm:$0xff]
    %v386 = vld [vmem:[#allocation5 + $0x750] sm:$0xff]
    %v387 = vld [vmem:[#allocation5 + $0x758] sm:$0xff]
    %v388 = vld [vmem:[#allocation5 + $0x760] sm:$0xff]
    %v389 = vld [vmem:[#allocation5 + $0x768] sm:$0xff]
    %v390 = vld [vmem:[#allocation5 + $0x770] sm:$0xff]
    %v391 = vld [vmem:[#allocation5 + $0x778] sm:$0xff]
    %v392 = vld [vmem:[#allocation5 + $0x780] sm:$0xff]
    %v393 = vld [vmem:[#allocation5 + $0x788] sm:$0xff]
    %v394 = vld [vmem:[#allocation5 + $0x790] sm:$0xff]
    %v395 = vld [vmem:[#allocation5 + $0x798] sm:$0xff]
    %v396 = vld [vmem:[#allocation5 + $0x7a0] sm:$0xff]
    %v397 = vld [vmem:[#allocation5 + $0x7a8] sm:$0xff]
    %v398 = vld [vmem:[#allocation5 + $0x7b0] sm:$0xff]
    %v399 = vld [vmem:[#allocation5 + $0x7b8] sm:$0xff]
    %v400 = vld [vmem:[#allocation5 + $0x7c0] sm:$0xff]
    %v401 = vld [vmem:[#allocation5 + $0x7c8] sm:$0xff]
    %v402 = vld [vmem:[#allocation5 + $0x7d0] sm:$0xff]
    %v403 = vld [vmem:[#allocation5 + $0x7d8] sm:$0xff]
    %v404 = vld [vmem:[#allocation5 + $0x7e0] sm:$0xff]
    %v405 = vld [vmem:[#allocation5 + $0x7e8] sm:$0xff]
    %v406 = vld [vmem:[#allocation5 + $0x7f0] sm:$0xff]
    %v407 = vld [vmem:[#allocation5 + $0x7f8] sm:$0xff]
    %v664 = vunpack.c.l.b16 %v152
    %v665 = vunpack.c.h.b16 %v152
    %v666 = vunpack.c.l.b16 %v153
    %v667 = vunpack.c.h.b16 %v153
    %v668 = vunpack.c.l.b16 %v154
    %v669 = vunpack.c.h.b16 %v154
    %v670 = vunpack.c.l.b16 %v155
    %v671 = vunpack.c.h.b16 %v155
    %v672 = vunpack.c.l.b16 %v156
    %v673 = vunpack.c.h.b16 %v156
    %v674 = vunpack.c.l.b16 %v157
    %v675 = vunpack.c.h.b16 %v157
    %v676 = vunpack.c.l.b16 %v158
    %v677 = vunpack.c.h.b16 %v158
    %v678 = vunpack.c.l.b16 %v159
    %v679 = vunpack.c.h.b16 %v159
    %v680 = vunpack.c.l.b16 %v160
    %v681 = vunpack.c.h.b16 %v160
    %v682 = vunpack.c.l.b16 %v161
    %v683 = vunpack.c.h.b16 %v161
    %v684 = vunpack.c.l.b16 %v162
    %v685 = vunpack.c.h.b16 %v162
    %v686 = vunpack.c.l.b16 %v163
    %v687 = vunpack.c.h.b16 %v163
    %v688 = vunpack.c.l.b16 %v164
    %v689 = vunpack.c.h.b16 %v164
    %v690 = vunpack.c.l.b16 %v165
    %v691 = vunpack.c.h.b16 %v165
    %v692 = vunpack.c.l.b16 %v166
    %v693 = vunpack.c.h.b16 %v166
    %v694 = vunpack.c.l.b16 %v167
    %v695 = vunpack.c.h.b16 %v167
    %v696 = vunpack.c.l.b16 %v168
    %v697 = vunpack.c.h.b16 %v168
    %v698 = vunpack.c.l.b16 %v169
    %v699 = vunpack.c.h.b16 %v169
    %v700 = vunpack.c.l.b16 %v170
    %v701 = vunpack.c.h.b16 %v170
    %v702 = vunpack.c.l.b16 %v171
    %v703 = vunpack.c.h.b16 %v171
    %v704 = vunpack.c.l.b16 %v172
    %v705 = vunpack.c.h.b16 %v172
    %v706 = vunpack.c.l.b16 %v173
    %v707 = vunpack.c.h.b16 %v173
    %v708 = vunpack.c.l.b16 %v174
    %v709 = vunpack.c.h.b16 %v174
    %v710 = vunpack.c.l.b16 %v175
    %v711 = vunpack.c.h.b16 %v175
    %v712 = vunpack.c.l.b16 %v176
    %v713 = vunpack.c.h.b16 %v176
    %v714 = vunpack.c.l.b16 %v177
    %v715 = vunpack.c.h.b16 %v177
    %v716 = vunpack.c.l.b16 %v178
    %v717 = vunpack.c.h.b16 %v178
    %v718 = vunpack.c.l.b16 %v179
    %v719 = vunpack.c.h.b16 %v179
    %v720 = vunpack.c.l.b16 %v180
    %v721 = vunpack.c.h.b16 %v180
    %v722 = vunpack.c.l.b16 %v181
    %v723 = vunpack.c.h.b16 %v181
    %v724 = vunpack.c.l.b16 %v182
    %v725 = vunpack.c.h.b16 %v182
    %v726 = vunpack.c.l.b16 %v183
    %v727 = vunpack.c.h.b16 %v183
    %v728 = vunpack.c.l.b16 %v184
    %v729 = vunpack.c.h.b16 %v184
    %v730 = vunpack.c.l.b16 %v185
    %v731 = vunpack.c.h.b16 %v185
    %v732 = vunpack.c.l.b16 %v186
    %v733 = vunpack.c.h.b16 %v186
    %v734 = vunpack.c.l.b16 %v187
    %v735 = vunpack.c.h.b16 %v187
    %v736 = vunpack.c.l.b16 %v188
    %v737 = vunpack.c.h.b16 %v188
    %v738 = vunpack.c.l.b16 %v189
    %v739 = vunpack.c.h.b16 %v189
    %v740 = vunpack.c.l.b16 %v190
    %v741 = vunpack.c.h.b16 %v190
    %v742 = vunpack.c.l.b16 %v191
    %v743 = vunpack.c.h.b16 %v191
    %v744 = vunpack.c.l.b16 %v192
    %v745 = vunpack.c.h.b16 %v192
    %v746 = vunpack.c.l.b16 %v193
    %v747 = vunpack.c.h.b16 %v193
    %v748 = vunpack.c.l.b16 %v194
    %v749 = vunpack.c.h.b16 %v194
    %v750 = vunpack.c.l.b16 %v195
    %v751 = vunpack.c.h.b16 %v195
    %v752 = vunpack.c.l.b16 %v196
    %v753 = vunpack.c.h.b16 %v196
    %v754 = vunpack.c.l.b16 %v197
    %v755 = vunpack.c.h.b16 %v197
    %v756 = vunpack.c.l.b16 %v198
    %v757 = vunpack.c.h.b16 %v198
    %v758 = vunpack.c.l.b16 %v199
    %v759 = vunpack.c.h.b16 %v199
    %v760 = vunpack.c.l.b16 %v200
    %v761 = vunpack.c.h.b16 %v200
    %v762 = vunpack.c.l.b16 %v201
    %v763 = vunpack.c.h.b16 %v201
    %v764 = vunpack.c.l.b16 %v202
    %v765 = vunpack.c.h.b16 %v202
    %v766 = vunpack.c.l.b16 %v203
    %v767 = vunpack.c.h.b16 %v203
    %v768 = vunpack.c.l.b16 %v204
    %v769 = vunpack.c.h.b16 %v204
    %v770 = vunpack.c.l.b16 %v205
    %v771 = vunpack.c.h.b16 %v205
    %v772 = vunpack.c.l.b16 %v206
    %v773 = vunpack.c.h.b16 %v206
    %v774 = vunpack.c.l.b16 %v207
    %v775 = vunpack.c.h.b16 %v207
    %v776 = vunpack.c.l.b16 %v208
    %v777 = vunpack.c.h.b16 %v208
    %v778 = vunpack.c.l.b16 %v209
    %v779 = vunpack.c.h.b16 %v209
    %v780 = vunpack.c.l.b16 %v210
    %v781 = vunpack.c.h.b16 %v210
    %v782 = vunpack.c.l.b16 %v211
    %v783 = vunpack.c.h.b16 %v211
    %v784 = vunpack.c.l.b16 %v212
    %v785 = vunpack.c.h.b16 %v212
    %v786 = vunpack.c.l.b16 %v213
    %v787 = vunpack.c.h.b16 %v213
    %v788 = vunpack.c.l.b16 %v214
    %v789 = vunpack.c.h.b16 %v214
    %v790 = vunpack.c.l.b16 %v215
    %v791 = vunpack.c.h.b16 %v215
    %v792 = vunpack.c.l.b16 %v216
    %v793 = vunpack.c.h.b16 %v216
    %v794 = vunpack.c.l.b16 %v217
    %v795 = vunpack.c.h.b16 %v217
    %v796 = vunpack.c.l.b16 %v218
    %v797 = vunpack.c.h.b16 %v218
    %v798 = vunpack.c.l.b16 %v219
    %v799 = vunpack.c.h.b16 %v219
    %v800 = vunpack.c.l.b16 %v220
    %v801 = vunpack.c.h.b16 %v220
    %v802 = vunpack.c.l.b16 %v221
    %v803 = vunpack.c.h.b16 %v221
    %v804 = vunpack.c.l.b16 %v222
    %v805 = vunpack.c.h.b16 %v222
    %v806 = vunpack.c.l.b16 %v223
    %v807 = vunpack.c.h.b16 %v223
    %v808 = vunpack.c.l.b16 %v224
    %v809 = vunpack.c.h.b16 %v224
    %v810 = vunpack.c.l.b16 %v225
    %v811 = vunpack.c.h.b16 %v225
    %v812 = vunpack.c.l.b16 %v226
    %v813 = vunpack.c.h.b16 %v226
    %v814 = vunpack.c.l.b16 %v227
    %v815 = vunpack.c.h.b16 %v227
    %v816 = vunpack.c.l.b16 %v228
    %v817 = vunpack.c.h.b16 %v228
    %v818 = vunpack.c.l.b16 %v229
    %v819 = vunpack.c.h.b16 %v229
    %v820 = vunpack.c.l.b16 %v230
    %v821 = vunpack.c.h.b16 %v230
    %v822 = vunpack.c.l.b16 %v231
    %v823 = vunpack.c.h.b16 %v231
    %v824 = vunpack.c.l.b16 %v232
    %v825 = vunpack.c.h.b16 %v232
    %v826 = vunpack.c.l.b16 %v233
    %v827 = vunpack.c.h.b16 %v233
    %v828 = vunpack.c.l.b16 %v234
    %v829 = vunpack.c.h.b16 %v234
    %v830 = vunpack.c.l.b16 %v235
    %v831 = vunpack.c.h.b16 %v235
    %v832 = vunpack.c.l.b16 %v236
    %v833 = vunpack.c.h.b16 %v236
    %v834 = vunpack.c.l.b16 %v237
    %v835 = vunpack.c.h.b16 %v237
    %v836 = vunpack.c.l.b16 %v238
    %v837 = vunpack.c.h.b16 %v238
    %v838 = vunpack.c.l.b16 %v239
    %v839 = vunpack.c.h.b16 %v239
    %v840 = vunpack.c.l.b16 %v240
    %v841 = vunpack.c.h.b16 %v240
    %v842 = vunpack.c.l.b16 %v241
    %v843 = vunpack.c.h.b16 %v241
    %v844 = vunpack.c.l.b16 %v242
    %v845 = vunpack.c.h.b16 %v242
    %v846 = vunpack.c.l.b16 %v243
    %v847 = vunpack.c.h.b16 %v243
    %v848 = vunpack.c.l.b16 %v244
    %v849 = vunpack.c.h.b16 %v244
    %v850 = vunpack.c.l.b16 %v245
    %v851 = vunpack.c.h.b16 %v245
    %v852 = vunpack.c.l.b16 %v246
    %v853 = vunpack.c.h.b16 %v246
    %v854 = vunpack.c.l.b16 %v247
    %v855 = vunpack.c.h.b16 %v247
    %v856 = vunpack.c.l.b16 %v248
    %v857 = vunpack.c.h.b16 %v248
    %v858 = vunpack.c.l.b16 %v249
    %v859 = vunpack.c.h.b16 %v249
    %v860 = vunpack.c.l.b16 %v250
    %v861 = vunpack.c.h.b16 %v250
    %v862 = vunpack.c.l.b16 %v251
    %v863 = vunpack.c.h.b16 %v251
    %v864 = vunpack.c.l.b16 %v252
    %v865 = vunpack.c.h.b16 %v252
    %v866 = vunpack.c.l.b16 %v253
    %v867 = vunpack.c.h.b16 %v253
    %v868 = vunpack.c.l.b16 %v254
    %v869 = vunpack.c.h.b16 %v254
    %v870 = vunpack.c.l.b16 %v255
    %v871 = vunpack.c.h.b16 %v255
    %v872 = vunpack.c.l.b16 %v256
    %v873 = vunpack.c.h.b16 %v256
    %v874 = vunpack.c.l.b16 %v257
    %v875 = vunpack.c.h.b16 %v257
    %v876 = vunpack.c.l.b16 %v258
    %v877 = vunpack.c.h.b16 %v258
    %v878 = vunpack.c.l.b16 %v259
    %v879 = vunpack.c.h.b16 %v259
    %v880 = vunpack.c.l.b16 %v260
    %v881 = vunpack.c.h.b16 %v260
    %v882 = vunpack.c.l.b16 %v261
    %v883 = vunpack.c.h.b16 %v261
    %v884 = vunpack.c.l.b16 %v262
    %v885 = vunpack.c.h.b16 %v262
    %v886 = vunpack.c.l.b16 %v263
    %v887 = vunpack.c.h.b16 %v263
    %v888 = vunpack.c.l.b16 %v264
    %v889 = vunpack.c.h.b16 %v264
    %v890 = vunpack.c.l.b16 %v265
    %v891 = vunpack.c.h.b16 %v265
    %v892 = vunpack.c.l.b16 %v266
    %v893 = vunpack.c.h.b16 %v266
    %v894 = vunpack.c.l.b16 %v267
    %v895 = vunpack.c.h.b16 %v267
    %v896 = vunpack.c.l.b16 %v268
    %v897 = vunpack.c.h.b16 %v268
    %v898 = vunpack.c.l.b16 %v269
    %v899 = vunpack.c.h.b16 %v269
    %v900 = vunpack.c.l.b16 %v270
    %v901 = vunpack.c.h.b16 %v270
    %v902 = vunpack.c.l.b16 %v271
    %v903 = vunpack.c.h.b16 %v271
    %v904 = vunpack.c.l.b16 %v272
    %v905 = vunpack.c.h.b16 %v272
    %v906 = vunpack.c.l.b16 %v273
    %v907 = vunpack.c.h.b16 %v273
    %v908 = vunpack.c.l.b16 %v274
    %v909 = vunpack.c.h.b16 %v274
    %v910 = vunpack.c.l.b16 %v275
    %v911 = vunpack.c.h.b16 %v275
    %v912 = vunpack.c.l.b16 %v276
    %v913 = vunpack.c.h.b16 %v276
    %v914 = vunpack.c.l.b16 %v277
    %v915 = vunpack.c.h.b16 %v277
    %v916 = vunpack.c.l.b16 %v278
    %v917 = vunpack.c.h.b16 %v278
    %v918 = vunpack.c.l.b16 %v279
    %v919 = vunpack.c.h.b16 %v279
    %v920 = vunpack.c.l.b16 %v280
    %v921 = vunpack.c.h.b16 %v280
    %v922 = vunpack.c.l.b16 %v281
    %v923 = vunpack.c.h.b16 %v281
    %v924 = vunpack.c.l.b16 %v282
    %v925 = vunpack.c.h.b16 %v282
    %v926 = vunpack.c.l.b16 %v283
    %v927 = vunpack.c.h.b16 %v283
    %v928 = vunpack.c.l.b16 %v284
    %v929 = vunpack.c.h.b16 %v284
    %v930 = vunpack.c.l.b16 %v285
    %v931 = vunpack.c.h.b16 %v285
    %v932 = vunpack.c.l.b16 %v286
    %v933 = vunpack.c.h.b16 %v286
    %v934 = vunpack.c.l.b16 %v287
    %v935 = vunpack.c.h.b16 %v287
    %v936 = vunpack.c.l.b16 %v288
    %v937 = vunpack.c.h.b16 %v288
    %v938 = vunpack.c.l.b16 %v289
    %v939 = vunpack.c.h.b16 %v289
    %v940 = vunpack.c.l.b16 %v290
    %v941 = vunpack.c.h.b16 %v290
    %v942 = vunpack.c.l.b16 %v291
    %v943 = vunpack.c.h.b16 %v291
    %v944 = vunpack.c.l.b16 %v292
    %v945 = vunpack.c.h.b16 %v292
    %v946 = vunpack.c.l.b16 %v293
    %v947 = vunpack.c.h.b16 %v293
    %v948 = vunpack.c.l.b16 %v294
    %v949 = vunpack.c.h.b16 %v294
    %v950 = vunpack.c.l.b16 %v295
    %v951 = vunpack.c.h.b16 %v295
    %v952 = vunpack.c.l.b16 %v296
    %v953 = vunpack.c.h.b16 %v296
    %v954 = vunpack.c.l.b16 %v297
    %v955 = vunpack.c.h.b16 %v297
    %v956 = vunpack.c.l.b16 %v298
    %v957 = vunpack.c.h.b16 %v298
    %v958 = vunpack.c.l.b16 %v299
    %v959 = vunpack.c.h.b16 %v299
    %v960 = vunpack.c.l.b16 %v300
    %v961 = vunpack.c.h.b16 %v300
    %v962 = vunpack.c.l.b16 %v301
    %v963 = vunpack.c.h.b16 %v301
    %v964 = vunpack.c.l.b16 %v302
    %v965 = vunpack.c.h.b16 %v302
    %v966 = vunpack.c.l.b16 %v303
    %v967 = vunpack.c.h.b16 %v303
    %v968 = vunpack.c.l.b16 %v304
    %v969 = vunpack.c.h.b16 %v304
    %v970 = vunpack.c.l.b16 %v305
    %v971 = vunpack.c.h.b16 %v305
    %v972 = vunpack.c.l.b16 %v306
    %v973 = vunpack.c.h.b16 %v306
    %v974 = vunpack.c.l.b16 %v307
    %v975 = vunpack.c.h.b16 %v307
    %v976 = vunpack.c.l.b16 %v308
    %v977 = vunpack.c.h.b16 %v308
    %v978 = vunpack.c.l.b16 %v309
    %v979 = vunpack.c.h.b16 %v309
    %v980 = vunpack.c.l.b16 %v310
    %v981 = vunpack.c.h.b16 %v310
    %v982 = vunpack.c.l.b16 %v311
    %v983 = vunpack.c.h.b16 %v311
    %v984 = vunpack.c.l.b16 %v312
    %v985 = vunpack.c.h.b16 %v312
    %v986 = vunpack.c.l.b16 %v313
    %v987 = vunpack.c.h.b16 %v313
    %v988 = vunpack.c.l.b16 %v314
    %v989 = vunpack.c.h.b16 %v314
    %v990 = vunpack.c.l.b16 %v315
    %v991 = vunpack.c.h.b16 %v315
    %v992 = vunpack.c.l.b16 %v316
    %v993 = vunpack.c.h.b16 %v316
    %v994 = vunpack.c.l.b16 %v317
    %v995 = vunpack.c.h.b16 %v317
    %v996 = vunpack.c.l.b16 %v318
    %v997 = vunpack.c.h.b16 %v318
    %v998 = vunpack.c.l.b16 %v319
    %v999 = vunpack.c.h.b16 %v319
    %v1000 = vunpack.c.l.b16 %v320
    %v1001 = vunpack.c.h.b16 %v320
    %v1002 = vunpack.c.l.b16 %v321
    %v1003 = vunpack.c.h.b16 %v321
    %v1004 = vunpack.c.l.b16 %v322
    %v1005 = vunpack.c.h.b16 %v322
    %v1006 = vunpack.c.l.b16 %v323
    %v1007 = vunpack.c.h.b16 %v323
    %v1008 = vunpack.c.l.b16 %v324
    %v1009 = vunpack.c.h.b16 %v324
    %v1010 = vunpack.c.l.b16 %v325
    %v1011 = vunpack.c.h.b16 %v325
    %v1012 = vunpack.c.l.b16 %v326
    %v1013 = vunpack.c.h.b16 %v326
    %v1014 = vunpack.c.l.b16 %v327
    %v1015 = vunpack.c.h.b16 %v327
    %v1016 = vunpack.c.l.b16 %v328
    %v1017 = vunpack.c.h.b16 %v328
    %v1018 = vunpack.c.l.b16 %v329
    %v1019 = vunpack.c.h.b16 %v329
    %v1020 = vunpack.c.l.b16 %v330
    %v1021 = vunpack.c.h.b16 %v330
    %v1022 = vunpack.c.l.b16 %v331
    %v1023 = vunpack.c.h.b16 %v331
    %v1024 = vunpack.c.l.b16 %v332
    %v1025 = vunpack.c.h.b16 %v332
    %v1026 = vunpack.c.l.b16 %v333
    %v1027 = vunpack.c.h.b16 %v333
    %v1028 = vunpack.c.l.b16 %v334
    %v1029 = vunpack.c.h.b16 %v334
    %v1030 = vunpack.c.l.b16 %v335
    %v1031 = vunpack.c.h.b16 %v335
    %v1032 = vunpack.c.l.b16 %v336
    %v1033 = vunpack.c.h.b16 %v336
    %v1034 = vunpack.c.l.b16 %v337
    %v1035 = vunpack.c.h.b16 %v337
    %v1036 = vunpack.c.l.b16 %v338
    %v1037 = vunpack.c.h.b16 %v338
    %v1038 = vunpack.c.l.b16 %v339
    %v1039 = vunpack.c.h.b16 %v339
    %v1040 = vunpack.c.l.b16 %v340
    %v1041 = vunpack.c.h.b16 %v340
    %v1042 = vunpack.c.l.b16 %v341
    %v1043 = vunpack.c.h.b16 %v341
    %v1044 = vunpack.c.l.b16 %v342
    %v1045 = vunpack.c.h.b16 %v342
    %v1046 = vunpack.c.l.b16 %v343
    %v1047 = vunpack.c.h.b16 %v343
    %v1048 = vunpack.c.l.b16 %v344
    %v1049 = vunpack.c.h.b16 %v344
    %v1050 = vunpack.c.l.b16 %v345
    %v1051 = vunpack.c.h.b16 %v345
    %v1052 = vunpack.c.l.b16 %v346
    %v1053 = vunpack.c.h.b16 %v346
    %v1054 = vunpack.c.l.b16 %v347
    %v1055 = vunpack.c.h.b16 %v347
    %v1056 = vunpack.c.l.b16 %v348
    %v1057 = vunpack.c.h.b16 %v348
    %v1058 = vunpack.c.l.b16 %v349
    %v1059 = vunpack.c.h.b16 %v349
    %v1060 = vunpack.c.l.b16 %v350
    %v1061 = vunpack.c.h.b16 %v350
    %v1062 = vunpack.c.l.b16 %v351
    %v1063 = vunpack.c.h.b16 %v351
    %v1064 = vunpack.c.l.b16 %v352
    %v1065 = vunpack.c.h.b16 %v352
    %v1066 = vunpack.c.l.b16 %v353
    %v1067 = vunpack.c.h.b16 %v353
    %v1068 = vunpack.c.l.b16 %v354
    %v1069 = vunpack.c.h.b16 %v354
    %v1070 = vunpack.c.l.b16 %v355
    %v1071 = vunpack.c.h.b16 %v355
    %v1072 = vunpack.c.l.b16 %v356
    %v1073 = vunpack.c.h.b16 %v356
    %v1074 = vunpack.c.l.b16 %v357
    %v1075 = vunpack.c.h.b16 %v357
    %v1076 = vunpack.c.l.b16 %v358
    %v1077 = vunpack.c.h.b16 %v358
    %v1078 = vunpack.c.l.b16 %v359
    %v1079 = vunpack.c.h.b16 %v359
    %v1080 = vunpack.c.l.b16 %v360
    %v1081 = vunpack.c.h.b16 %v360
    %v1082 = vunpack.c.l.b16 %v361
    %v1083 = vunpack.c.h.b16 %v361
    %v1084 = vunpack.c.l.b16 %v362
    %v1085 = vunpack.c.h.b16 %v362
    %v1086 = vunpack.c.l.b16 %v363
    %v1087 = vunpack.c.h.b16 %v363
    %v1088 = vunpack.c.l.b16 %v364
    %v1089 = vunpack.c.h.b16 %v364
    %v1090 = vunpack.c.l.b16 %v365
    %v1091 = vunpack.c.h.b16 %v365
    %v1092 = vunpack.c.l.b16 %v366
    %v1093 = vunpack.c.h.b16 %v366
    %v1094 = vunpack.c.l.b16 %v367
    %v1095 = vunpack.c.h.b16 %v367
    %v1096 = vunpack.c.l.b16 %v368
    %v1097 = vunpack.c.h.b16 %v368
    %v1098 = vunpack.c.l.b16 %v369
    %v1099 = vunpack.c.h.b16 %v369
    %v1100 = vunpack.c.l.b16 %v370
    %v1101 = vunpack.c.h.b16 %v370
    %v1102 = vunpack.c.l.b16 %v371
    %v1103 = vunpack.c.h.b16 %v371
    %v1104 = vunpack.c.l.b16 %v372
    %v1105 = vunpack.c.h.b16 %v372
    %v1106 = vunpack.c.l.b16 %v373
    %v1107 = vunpack.c.h.b16 %v373
    %v1108 = vunpack.c.l.b16 %v374
    %v1109 = vunpack.c.h.b16 %v374
    %v1110 = vunpack.c.l.b16 %v375
    %v1111 = vunpack.c.h.b16 %v375
    %v1112 = vunpack.c.l.b16 %v376
    %v1113 = vunpack.c.h.b16 %v376
    %v1114 = vunpack.c.l.b16 %v377
    %v1115 = vunpack.c.h.b16 %v377
    %v1116 = vunpack.c.l.b16 %v378
    %v1117 = vunpack.c.h.b16 %v378
    %v1118 = vunpack.c.l.b16 %v379
    %v1119 = vunpack.c.h.b16 %v379
    %v1120 = vunpack.c.l.b16 %v380
    %v1121 = vunpack.c.h.b16 %v380
    %v1122 = vunpack.c.l.b16 %v381
    %v1123 = vunpack.c.h.b16 %v381
    %v1124 = vunpack.c.l.b16 %v382
    %v1125 = vunpack.c.h.b16 %v382
    %v1126 = vunpack.c.l.b16 %v383
    %v1127 = vunpack.c.h.b16 %v383
    %v1128 = vunpack.c.l.b16 %v384
    %v1129 = vunpack.c.h.b16 %v384
    %v1130 = vunpack.c.l.b16 %v385
    %v1131 = vunpack.c.h.b16 %v385
    %v1132 = vunpack.c.l.b16 %v386
    %v1133 = vunpack.c.h.b16 %v386
    %v1134 = vunpack.c.l.b16 %v387
    %v1135 = vunpack.c.h.b16 %v387
    %v1136 = vunpack.c.l.b16 %v388
    %v1137 = vunpack.c.h.b16 %v388
    %v1138 = vunpack.c.l.b16 %v389
    %v1139 = vunpack.c.h.b16 %v389
    %v1140 = vunpack.c.l.b16 %v390
    %v1141 = vunpack.c.h.b16 %v390
    %v1142 = vunpack.c.l.b16 %v391
    %v1143 = vunpack.c.h.b16 %v391
    %v1144 = vunpack.c.l.b16 %v392
    %v1145 = vunpack.c.h.b16 %v392
    %v1146 = vunpack.c.l.b16 %v393
    %v1147 = vunpack.c.h.b16 %v393
    %v1148 = vunpack.c.l.b16 %v394
    %v1149 = vunpack.c.h.b16 %v394
    %v1150 = vunpack.c.l.b16 %v395
    %v1151 = vunpack.c.h.b16 %v395
    %v1152 = vunpack.c.l.b16 %v396
    %v1153 = vunpack.c.h.b16 %v396
    %v1154 = vunpack.c.l.b16 %v397
    %v1155 = vunpack.c.h.b16 %v397
    %v1156 = vunpack.c.l.b16 %v398
    %v1157 = vunpack.c.h.b16 %v398
    %v1158 = vunpack.c.l.b16 %v399
    %v1159 = vunpack.c.h.b16 %v399
    %v1160 = vunpack.c.l.b16 %v400
    %v1161 = vunpack.c.h.b16 %v400
    %v1162 = vunpack.c.l.b16 %v401
    %v1163 = vunpack.c.h.b16 %v401
    %v1164 = vunpack.c.l.b16 %v402
    %v1165 = vunpack.c.h.b16 %v402
    %v1166 = vunpack.c.l.b16 %v403
    %v1167 = vunpack.c.h.b16 %v403
    %v1168 = vunpack.c.l.b16 %v404
    %v1169 = vunpack.c.h.b16 %v404
    %v1170 = vunpack.c.l.b16 %v405
    %v1171 = vunpack.c.h.b16 %v405
    %v1172 = vunpack.c.l.b16 %v406
    %v1173 = vunpack.c.h.b16 %v406
    %v1174 = vunpack.c.l.b16 %v407
    %v1175 = vunpack.c.h.b16 %v407
    %v1176 = vpack.c.b16 %v666, %v664
    %v1177 = vpack.c.b16 %v667, %v665
    %v1178 = vpack.c.b16 %v670, %v668
    %v1179 = vpack.c.b16 %v671, %v669
    %v1180 = vpack.c.b16 %v674, %v672
    %v1181 = vpack.c.b16 %v675, %v673
    %v1182 = vpack.c.b16 %v678, %v676
    %v1183 = vpack.c.b16 %v679, %v677
    %v1184 = vpack.c.b16 %v682, %v680
    %v1185 = vpack.c.b16 %v683, %v681
    %v1186 = vpack.c.b16 %v686, %v684
    %v1187 = vpack.c.b16 %v687, %v685
    %v1188 = vpack.c.b16 %v690, %v688
    %v1189 = vpack.c.b16 %v691, %v689
    %v1190 = vpack.c.b16 %v694, %v692
    %v1191 = vpack.c.b16 %v695, %v693
    %v1192 = vpack.c.b16 %v698, %v696
    %v1193 = vpack.c.b16 %v699, %v697
    %v1194 = vpack.c.b16 %v702, %v700
    %v1195 = vpack.c.b16 %v703, %v701
    %v1196 = vpack.c.b16 %v706, %v704
    %v1197 = vpack.c.b16 %v707, %v705
    %v1198 = vpack.c.b16 %v710, %v708
    %v1199 = vpack.c.b16 %v711, %v709
    %v1200 = vpack.c.b16 %v714, %v712
    %v1201 = vpack.c.b16 %v715, %v713
    %v1202 = vpack.c.b16 %v718, %v716
    %v1203 = vpack.c.b16 %v719, %v717
    %v1204 = vpack.c.b16 %v722, %v720
    %v1205 = vpack.c.b16 %v723, %v721
    %v1206 = vpack.c.b16 %v726, %v724
    %v1207 = vpack.c.b16 %v727, %v725
    %v1208 = vpack.c.b16 %v730, %v728
    %v1209 = vpack.c.b16 %v731, %v729
    %v1210 = vpack.c.b16 %v734, %v732
    %v1211 = vpack.c.b16 %v735, %v733
    %v1212 = vpack.c.b16 %v738, %v736
    %v1213 = vpack.c.b16 %v739, %v737
    %v1214 = vpack.c.b16 %v742, %v740
    %v1215 = vpack.c.b16 %v743, %v741
    %v1216 = vpack.c.b16 %v746, %v744
    %v1217 = vpack.c.b16 %v747, %v745
    %v1218 = vpack.c.b16 %v750, %v748
    %v1219 = vpack.c.b16 %v751, %v749
    %v1220 = vpack.c.b16 %v754, %v752
    %v1221 = vpack.c.b16 %v755, %v753
    %v1222 = vpack.c.b16 %v758, %v756
    %v1223 = vpack.c.b16 %v759, %v757
    %v1224 = vpack.c.b16 %v762, %v760
    %v1225 = vpack.c.b16 %v763, %v761
    %v1226 = vpack.c.b16 %v766, %v764
    %v1227 = vpack.c.b16 %v767, %v765
    %v1228 = vpack.c.b16 %v770, %v768
    %v1229 = vpack.c.b16 %v771, %v769
    %v1230 = vpack.c.b16 %v774, %v772
    %v1231 = vpack.c.b16 %v775, %v773
    %v1232 = vpack.c.b16 %v778, %v776
    %v1233 = vpack.c.b16 %v779, %v777
    %v1234 = vpack.c.b16 %v782, %v780
    %v1235 = vpack.c.b16 %v783, %v781
    %v1236 = vpack.c.b16 %v786, %v784
    %v1237 = vpack.c.b16 %v787, %v785
    %v1238 = vpack.c.b16 %v790, %v788
    %v1239 = vpack.c.b16 %v791, %v789
    %v1240 = vpack.c.b16 %v794, %v792
    %v1241 = vpack.c.b16 %v795, %v793
    %v1242 = vpack.c.b16 %v798, %v796
    %v1243 = vpack.c.b16 %v799, %v797
    %v1244 = vpack.c.b16 %v802, %v800
    %v1245 = vpack.c.b16 %v803, %v801
    %v1246 = vpack.c.b16 %v806, %v804
    %v1247 = vpack.c.b16 %v807, %v805
    %v1248 = vpack.c.b16 %v810, %v808
    %v1249 = vpack.c.b16 %v811, %v809
    %v1250 = vpack.c.b16 %v814, %v812
    %v1251 = vpack.c.b16 %v815, %v813
    %v1252 = vpack.c.b16 %v818, %v816
    %v1253 = vpack.c.b16 %v819, %v817
    %v1254 = vpack.c.b16 %v822, %v820
    %v1255 = vpack.c.b16 %v823, %v821
    %v1256 = vpack.c.b16 %v826, %v824
    %v1257 = vpack.c.b16 %v827, %v825
    %v1258 = vpack.c.b16 %v830, %v828
    %v1259 = vpack.c.b16 %v831, %v829
    %v1260 = vpack.c.b16 %v834, %v832
    %v1261 = vpack.c.b16 %v835, %v833
    %v1262 = vpack.c.b16 %v838, %v836
    %v1263 = vpack.c.b16 %v839, %v837
    %v1264 = vpack.c.b16 %v842, %v840
    %v1265 = vpack.c.b16 %v843, %v841
    %v1266 = vpack.c.b16 %v846, %v844
    %v1267 = vpack.c.b16 %v847, %v845
    %v1268 = vpack.c.b16 %v850, %v848
    %v1269 = vpack.c.b16 %v851, %v849
    %v1270 = vpack.c.b16 %v854, %v852
    %v1271 = vpack.c.b16 %v855, %v853
    %v1272 = vpack.c.b16 %v858, %v856
    %v1273 = vpack.c.b16 %v859, %v857
    %v1274 = vpack.c.b16 %v862, %v860
    %v1275 = vpack.c.b16 %v863, %v861
    %v1276 = vpack.c.b16 %v866, %v864
    %v1277 = vpack.c.b16 %v867, %v865
    %v1278 = vpack.c.b16 %v870, %v868
    %v1279 = vpack.c.b16 %v871, %v869
    %v1280 = vpack.c.b16 %v874, %v872
    %v1281 = vpack.c.b16 %v875, %v873
    %v1282 = vpack.c.b16 %v878, %v876
    %v1283 = vpack.c.b16 %v879, %v877
    %v1284 = vpack.c.b16 %v882, %v880
    %v1285 = vpack.c.b16 %v883, %v881
    %v1286 = vpack.c.b16 %v886, %v884
    %v1287 = vpack.c.b16 %v887, %v885
    %v1288 = vpack.c.b16 %v890, %v888
    %v1289 = vpack.c.b16 %v891, %v889
    %v1290 = vpack.c.b16 %v894, %v892
    %v1291 = vpack.c.b16 %v895, %v893
    %v1292 = vpack.c.b16 %v898, %v896
    %v1293 = vpack.c.b16 %v899, %v897
    %v1294 = vpack.c.b16 %v902, %v900
    %v1295 = vpack.c.b16 %v903, %v901
    %v1296 = vpack.c.b16 %v906, %v904
    %v1297 = vpack.c.b16 %v907, %v905
    %v1298 = vpack.c.b16 %v910, %v908
    %v1299 = vpack.c.b16 %v911, %v909
    %v1300 = vpack.c.b16 %v914, %v912
    %v1301 = vpack.c.b16 %v915, %v913
    %v1302 = vpack.c.b16 %v918, %v916
    %v1303 = vpack.c.b16 %v919, %v917
    %v1304 = vpack.c.b16 %v922, %v920
    %v1305 = vpack.c.b16 %v923, %v921
    %v1306 = vpack.c.b16 %v926, %v924
    %v1307 = vpack.c.b16 %v927, %v925
    %v1308 = vpack.c.b16 %v930, %v928
    %v1309 = vpack.c.b16 %v931, %v929
    %v1310 = vpack.c.b16 %v934, %v932
    %v1311 = vpack.c.b16 %v935, %v933
    %v1312 = vpack.c.b16 %v938, %v936
    %v1313 = vpack.c.b16 %v939, %v937
    %v1314 = vpack.c.b16 %v942, %v940
    %v1315 = vpack.c.b16 %v943, %v941
    %v1316 = vpack.c.b16 %v946, %v944
    %v1317 = vpack.c.b16 %v947, %v945
    %v1318 = vpack.c.b16 %v950, %v948
    %v1319 = vpack.c.b16 %v951, %v949
    %v1320 = vpack.c.b16 %v954, %v952
    %v1321 = vpack.c.b16 %v955, %v953
    %v1322 = vpack.c.b16 %v958, %v956
    %v1323 = vpack.c.b16 %v959, %v957
    %v1324 = vpack.c.b16 %v962, %v960
    %v1325 = vpack.c.b16 %v963, %v961
    %v1326 = vpack.c.b16 %v966, %v964
    %v1327 = vpack.c.b16 %v967, %v965
    %v1328 = vpack.c.b16 %v970, %v968
    %v1329 = vpack.c.b16 %v971, %v969
    %v1330 = vpack.c.b16 %v974, %v972
    %v1331 = vpack.c.b16 %v975, %v973
    %v1332 = vpack.c.b16 %v978, %v976
    %v1333 = vpack.c.b16 %v979, %v977
    %v1334 = vpack.c.b16 %v982, %v980
    %v1335 = vpack.c.b16 %v983, %v981
    %v1336 = vpack.c.b16 %v986, %v984
    %v1337 = vpack.c.b16 %v987, %v985
    %v1338 = vpack.c.b16 %v990, %v988
    %v1339 = vpack.c.b16 %v991, %v989
    %v1340 = vpack.c.b16 %v994, %v992
    %v1341 = vpack.c.b16 %v995, %v993
    %v1342 = vpack.c.b16 %v998, %v996
    %v1343 = vpack.c.b16 %v999, %v997
    %v1344 = vpack.c.b16 %v1002, %v1000
    %v1345 = vpack.c.b16 %v1003, %v1001
    %v1346 = vpack.c.b16 %v1006, %v1004
    %v1347 = vpack.c.b16 %v1007, %v1005
    %v1348 = vpack.c.b16 %v1010, %v1008
    %v1349 = vpack.c.b16 %v1011, %v1009
    %v1350 = vpack.c.b16 %v1014, %v1012
    %v1351 = vpack.c.b16 %v1015, %v1013
    %v1352 = vpack.c.b16 %v1018, %v1016
    %v1353 = vpack.c.b16 %v1019, %v1017
    %v1354 = vpack.c.b16 %v1022, %v1020
    %v1355 = vpack.c.b16 %v1023, %v1021
    %v1356 = vpack.c.b16 %v1026, %v1024
    %v1357 = vpack.c.b16 %v1027, %v1025
    %v1358 = vpack.c.b16 %v1030, %v1028
    %v1359 = vpack.c.b16 %v1031, %v1029
    %v1360 = vpack.c.b16 %v1034, %v1032
    %v1361 = vpack.c.b16 %v1035, %v1033
    %v1362 = vpack.c.b16 %v1038, %v1036
    %v1363 = vpack.c.b16 %v1039, %v1037
    %v1364 = vpack.c.b16 %v1042, %v1040
    %v1365 = vpack.c.b16 %v1043, %v1041
    %v1366 = vpack.c.b16 %v1046, %v1044
    %v1367 = vpack.c.b16 %v1047, %v1045
    %v1368 = vpack.c.b16 %v1050, %v1048
    %v1369 = vpack.c.b16 %v1051, %v1049
    %v1370 = vpack.c.b16 %v1054, %v1052
    %v1371 = vpack.c.b16 %v1055, %v1053
    %v1372 = vpack.c.b16 %v1058, %v1056
    %v1373 = vpack.c.b16 %v1059, %v1057
    %v1374 = vpack.c.b16 %v1062, %v1060
    %v1375 = vpack.c.b16 %v1063, %v1061
    %v1376 = vpack.c.b16 %v1066, %v1064
    %v1377 = vpack.c.b16 %v1067, %v1065
    %v1378 = vpack.c.b16 %v1070, %v1068
    %v1379 = vpack.c.b16 %v1071, %v1069
    %v1380 = vpack.c.b16 %v1074, %v1072
    %v1381 = vpack.c.b16 %v1075, %v1073
    %v1382 = vpack.c.b16 %v1078, %v1076
    %v1383 = vpack.c.b16 %v1079, %v1077
    %v1384 = vpack.c.b16 %v1082, %v1080
    %v1385 = vpack.c.b16 %v1083, %v1081
    %v1386 = vpack.c.b16 %v1086, %v1084
    %v1387 = vpack.c.b16 %v1087, %v1085
    %v1388 = vpack.c.b16 %v1090, %v1088
    %v1389 = vpack.c.b16 %v1091, %v1089
    %v1390 = vpack.c.b16 %v1094, %v1092
    %v1391 = vpack.c.b16 %v1095, %v1093
    %v1392 = vpack.c.b16 %v1098, %v1096
    %v1393 = vpack.c.b16 %v1099, %v1097
    %v1394 = vpack.c.b16 %v1102, %v1100
    %v1395 = vpack.c.b16 %v1103, %v1101
    %v1396 = vpack.c.b16 %v1106, %v1104
    %v1397 = vpack.c.b16 %v1107, %v1105
    %v1398 = vpack.c.b16 %v1110, %v1108
    %v1399 = vpack.c.b16 %v1111, %v1109
    %v1400 = vpack.c.b16 %v1114, %v1112
    %v1401 = vpack.c.b16 %v1115, %v1113
    %v1402 = vpack.c.b16 %v1118, %v1116
    %v1403 = vpack.c.b16 %v1119, %v1117
    %v1404 = vpack.c.b16 %v1122, %v1120
    %v1405 = vpack.c.b16 %v1123, %v1121
    %v1406 = vpack.c.b16 %v1126, %v1124
    %v1407 = vpack.c.b16 %v1127, %v1125
    %v1408 = vpack.c.b16 %v1130, %v1128
    %v1409 = vpack.c.b16 %v1131, %v1129
    %v1410 = vpack.c.b16 %v1134, %v1132
    %v1411 = vpack.c.b16 %v1135, %v1133
    %v1412 = vpack.c.b16 %v1138, %v1136
    %v1413 = vpack.c.b16 %v1139, %v1137
    %v1414 = vpack.c.b16 %v1142, %v1140
    %v1415 = vpack.c.b16 %v1143, %v1141
    %v1416 = vpack.c.b16 %v1146, %v1144
    %v1417 = vpack.c.b16 %v1147, %v1145
    %v1418 = vpack.c.b16 %v1150, %v1148
    %v1419 = vpack.c.b16 %v1151, %v1149
    %v1420 = vpack.c.b16 %v1154, %v1152
    %v1421 = vpack.c.b16 %v1155, %v1153
    %v1422 = vpack.c.b16 %v1158, %v1156
    %v1423 = vpack.c.b16 %v1159, %v1157
    %v1424 = vpack.c.b16 %v1162, %v1160
    %v1425 = vpack.c.b16 %v1163, %v1161
    %v1426 = vpack.c.b16 %v1166, %v1164
    %v1427 = vpack.c.b16 %v1167, %v1165
    %v1428 = vpack.c.b16 %v1170, %v1168
    %v1429 = vpack.c.b16 %v1171, %v1169
    %v1430 = vpack.c.b16 %v1174, %v1172
    %v1431 = vpack.c.b16 %v1175, %v1173
    %1688 = vmatprep.subr.bf16.mxu0 %v1191
    %1689 = vmatpush1.bf16.msra.mxu0 %v1190
    %1690 = vmatprep.subr.bf16.mxu0 %v1189
    %1691 = vmatpush1.bf16.msra.mxu0 %v1188
    %1692 = vmatprep.subr.bf16.mxu0 %v1187
    %1693 = vmatpush1.bf16.msra.mxu0 %v1186
    %1694 = vmatprep.subr.bf16.mxu0 %v1185
    %1695 = vmatpush1.bf16.msra.mxu0 %v1184
    %1696 = vmatprep.subr.bf16.mxu0 %v1183
    %1697 = vmatpush1.bf16.msra.mxu0 %v1182
    %1698 = vmatprep.subr.bf16.mxu0 %v1181
    %1699 = vmatpush1.bf16.msra.mxu0 %v1180
    %1700 = vmatprep.subr.bf16.mxu0 %v1179
    %1701 = vmatpush1.bf16.msra.mxu0 %v1178
    %1702 = vmatprep.subr.bf16.mxu0 %v1177
    %1703 = vmatpush1.bf16.msra.mxu0 %v1176
    %1704 = vmatprep.subr.bf16.mxu0 %v1207
    %1705 = vmatpush2.bf16.msra.mxu0 %v1206
    %1706 = vmatprep.subr.bf16.mxu0 %v1205
    %1707 = vmatpush2.bf16.msra.mxu0 %v1204
    %1708 = vmatprep.subr.bf16.mxu0 %v1203
    %1709 = vmatpush2.bf16.msra.mxu0 %v1202
    %1710 = vmatprep.subr.bf16.mxu0 %v1201
    %1711 = vmatpush2.bf16.msra.mxu0 %v1200
    %1712 = vmatprep.subr.bf16.mxu0 %v1199
    %1713 = vmatpush2.bf16.msra.mxu0 %v1198
    %1714 = vmatprep.subr.bf16.mxu0 %v1197
    %1715 = vmatpush2.bf16.msra.mxu0 %v1196
    %1716 = vmatprep.subr.bf16.mxu0 %v1195
    %1717 = vmatpush2.bf16.msra.mxu0 %v1194
    %1718 = vmatprep.subr.bf16.mxu0 %v1193
    %1719 = vmatpush2.bf16.msra.mxu0 %v1192
    %1720 = vmatprep.mubr.bf16.mxu0 %v137
    %1721 = vmatmul.mubr.bf16.gmra.mxu0 %v136
    %v1722 = vpop.f32.mrf.mxu0
    %v1723 = vadd.f32 0.0, %v1722
    %v1724 = vpop.f32.mrf.mxu0
    %v1725 = vadd.f32 0.0, %v1724
    %v1726 = vpop.f32.mrf.mxu0
    %v1727 = vpop.f32.mrf.mxu0
    %1728 = vdwg.mxu0
    %1729 = vmatprep.subr.bf16.mxu0 %v1223
    %1730 = vmatpush1.bf16.msra.mxu0 %v1222
    %1731 = vmatprep.subr.bf16.mxu0 %v1221
    %1732 = vmatpush1.bf16.msra.mxu0 %v1220
    %1733 = vmatprep.subr.bf16.mxu0 %v1219
    %1734 = vmatpush1.bf16.msra.mxu0 %v1218
    %1735 = vmatprep.subr.bf16.mxu0 %v1217
    %1736 = vmatpush1.bf16.msra.mxu0 %v1216
    %1737 = vmatprep.subr.bf16.mxu0 %v1215
    %1738 = vmatpush1.bf16.msra.mxu0 %v1214
    %1739 = vmatprep.subr.bf16.mxu0 %v1213
    %1740 = vmatpush1.bf16.msra.mxu0 %v1212
    %1741 = vmatprep.subr.bf16.mxu0 %v1211
    %1742 = vmatpush1.bf16.msra.mxu0 %v1210
    %1743 = vmatprep.subr.bf16.mxu0 %v1209
    %1744 = vmatpush1.bf16.msra.mxu0 %v1208
    %1745 = vmatprep.subr.bf16.mxu0 %v1239
    %1746 = vmatpush2.bf16.msra.mxu0 %v1238
    %1747 = vmatprep.subr.bf16.mxu0 %v1237
    %1748 = vmatpush2.bf16.msra.mxu0 %v1236
    %1749 = vmatprep.subr.bf16.mxu0 %v1235
    %1750 = vmatpush2.bf16.msra.mxu0 %v1234
    %1751 = vmatprep.subr.bf16.mxu0 %v1233
    %1752 = vmatpush2.bf16.msra.mxu0 %v1232
    %1753 = vmatprep.subr.bf16.mxu0 %v1231
    %1754 = vmatpush2.bf16.msra.mxu0 %v1230
    %1755 = vmatprep.subr.bf16.mxu0 %v1229
    %1756 = vmatpush2.bf16.msra.mxu0 %v1228
    %1757 = vmatprep.subr.bf16.mxu0 %v1227
    %1758 = vmatpush2.bf16.msra.mxu0 %v1226
    %1759 = vmatprep.subr.bf16.mxu0 %v1225
    %1760 = vmatpush2.bf16.msra.mxu0 %v1224
    %1761 = vmatprep.mubr.bf16.mxu0 %v139
    %1762 = vmatmul.mubr.bf16.gmra.mxu0 %v138
    %v1763 = vpop.f32.mrf.mxu0
    %v1764 = vadd.f32 %v1723, %v1763
    %v1765 = vpop.f32.mrf.mxu0
    %v1766 = vadd.f32 %v1725, %v1765
    %v1767 = vpop.f32.mrf.mxu0
    %v1768 = vpop.f32.mrf.mxu0
    %1769 = vdwg.mxu0
    %1770 = vmatprep.subr.bf16.mxu0 %v1255
    %1771 = vmatpush1.bf16.msra.mxu0 %v1254
    %1772 = vmatprep.subr.bf16.mxu0 %v1253
    %1773 = vmatpush1.bf16.msra.mxu0 %v1252
    %1774 = vmatprep.subr.bf16.mxu0 %v1251
    %1775 = vmatpush1.bf16.msra.mxu0 %v1250
    %1776 = vmatprep.subr.bf16.mxu0 %v1249
    %1777 = vmatpush1.bf16.msra.mxu0 %v1248
    %1778 = vmatprep.subr.bf16.mxu0 %v1247
    %1779 = vmatpush1.bf16.msra.mxu0 %v1246
    %1780 = vmatprep.subr.bf16.mxu0 %v1245
    %1781 = vmatpush1.bf16.msra.mxu0 %v1244
    %1782 = vmatprep.subr.bf16.mxu0 %v1243
    %1783 = vmatpush1.bf16.msra.mxu0 %v1242
    %1784 = vmatprep.subr.bf16.mxu0 %v1241
    %1785 = vmatpush1.bf16.msra.mxu0 %v1240
    %1786 = vmatprep.subr.bf16.mxu0 %v1271
    %1787 = vmatpush2.bf16.msra.mxu0 %v1270
    %1788 = vmatprep.subr.bf16.mxu0 %v1269
    %1789 = vmatpush2.bf16.msra.mxu0 %v1268
    %1790 = vmatprep.subr.bf16.mxu0 %v1267
    %1791 = vmatpush2.bf16.msra.mxu0 %v1266
    %1792 = vmatprep.subr.bf16.mxu0 %v1265
    %1793 = vmatpush2.bf16.msra.mxu0 %v1264
    %1794 = vmatprep.subr.bf16.mxu0 %v1263
    %1795 = vmatpush2.bf16.msra.mxu0 %v1262
    %1796 = vmatprep.subr.bf16.mxu0 %v1261
    %1797 = vmatpush2.bf16.msra.mxu0 %v1260
    %1798 = vmatprep.subr.bf16.mxu0 %v1259
    %1799 = vmatpush2.bf16.msra.mxu0 %v1258
    %1800 = vmatprep.subr.bf16.mxu0 %v1257
    %1801 = vmatpush2.bf16.msra.mxu0 %v1256
    %1802 = vmatprep.mubr.bf16.mxu0 %v141
    %1803 = vmatmul.mubr.bf16.gmra.mxu0 %v140
    %v1804 = vpop.f32.mrf.mxu0
    %v1805 = vadd.f32 %v1764, %v1804
    %v1806 = vpop.f32.mrf.mxu0
    %v1807 = vadd.f32 %v1766, %v1806
    %v1808 = vpop.f32.mrf.mxu0
    %v1809 = vpop.f32.mrf.mxu0
    %1810 = vdwg.mxu0
    %1811 = vmatprep.subr.bf16.mxu0 %v1287
    %1812 = vmatpush1.bf16.msra.mxu0 %v1286
    %1813 = vmatprep.subr.bf16.mxu0 %v1285
    %1814 = vmatpush1.bf16.msra.mxu0 %v1284
    %1815 = vmatprep.subr.bf16.mxu0 %v1283
    %1816 = vmatpush1.bf16.msra.mxu0 %v1282
    %1817 = vmatprep.subr.bf16.mxu0 %v1281
    %1818 = vmatpush1.bf16.msra.mxu0 %v1280
    %1819 = vmatprep.subr.bf16.mxu0 %v1279
    %1820 = vmatpush1.bf16.msra.mxu0 %v1278
    %1821 = vmatprep.subr.bf16.mxu0 %v1277
    %1822 = vmatpush1.bf16.msra.mxu0 %v1276
    %1823 = vmatprep.subr.bf16.mxu0 %v1275
    %1824 = vmatpush1.bf16.msra.mxu0 %v1274
    %1825 = vmatprep.subr.bf16.mxu0 %v1273
    %1826 = vmatpush1.bf16.msra.mxu0 %v1272
    %1827 = vmatprep.subr.bf16.mxu0 %v1303
    %1828 = vmatpush2.bf16.msra.mxu0 %v1302
    %1829 = vmatprep.subr.bf16.mxu0 %v1301
    %1830 = vmatpush2.bf16.msra.mxu0 %v1300
    %1831 = vmatprep.subr.bf16.mxu0 %v1299
    %1832 = vmatpush2.bf16.msra.mxu0 %v1298
    %1833 = vmatprep.subr.bf16.mxu0 %v1297
    %1834 = vmatpush2.bf16.msra.mxu0 %v1296
    %1835 = vmatprep.subr.bf16.mxu0 %v1295
    %1836 = vmatpush2.bf16.msra.mxu0 %v1294
    %1837 = vmatprep.subr.bf16.mxu0 %v1293
    %1838 = vmatpush2.bf16.msra.mxu0 %v1292
    %1839 = vmatprep.subr.bf16.mxu0 %v1291
    %1840 = vmatpush2.bf16.msra.mxu0 %v1290
    %1841 = vmatprep.subr.bf16.mxu0 %v1289
    %1842 = vmatpush2.bf16.msra.mxu0 %v1288
    %1843 = vmatprep.mubr.bf16.mxu0 %v143
    %1844 = vmatmul.mubr.bf16.gmra.mxu0 %v142
    %v1845 = vpop.f32.mrf.mxu0
    %v1846 = vadd.f32 %v1805, %v1845
    %v1847 = vpop.f32.mrf.mxu0
    %v1848 = vadd.f32 %v1807, %v1847
    %v1849 = vpop.f32.mrf.mxu0
    %v1850 = vpop.f32.mrf.mxu0
    %1851 = vdwg.mxu0
    %1852 = vmatprep.subr.bf16.mxu0 %v1319
    %1853 = vmatpush1.bf16.msra.mxu0 %v1318
    %1854 = vmatprep.subr.bf16.mxu0 %v1317
    %1855 = vmatpush1.bf16.msra.mxu0 %v1316
    %1856 = vmatprep.subr.bf16.mxu0 %v1315
    %1857 = vmatpush1.bf16.msra.mxu0 %v1314
    %1858 = vmatprep.subr.bf16.mxu0 %v1313
    %1859 = vmatpush1.bf16.msra.mxu0 %v1312
    %1860 = vmatprep.subr.bf16.mxu0 %v1311
    %1861 = vmatpush1.bf16.msra.mxu0 %v1310
    %1862 = vmatprep.subr.bf16.mxu0 %v1309
    %1863 = vmatpush1.bf16.msra.mxu0 %v1308
    %1864 = vmatprep.subr.bf16.mxu0 %v1307
    %1865 = vmatpush1.bf16.msra.mxu0 %v1306
    %1866 = vmatprep.subr.bf16.mxu0 %v1305
    %1867 = vmatpush1.bf16.msra.mxu0 %v1304
    %1868 = vmatprep.subr.bf16.mxu0 %v1335
    %1869 = vmatpush2.bf16.msra.mxu0 %v1334
    %1870 = vmatprep.subr.bf16.mxu0 %v1333
    %1871 = vmatpush2.bf16.msra.mxu0 %v1332
    %1872 = vmatprep.subr.bf16.mxu0 %v1331
    %1873 = vmatpush2.bf16.msra.mxu0 %v1330
    %1874 = vmatprep.subr.bf16.mxu0 %v1329
    %1875 = vmatpush2.bf16.msra.mxu0 %v1328
    %1876 = vmatprep.subr.bf16.mxu0 %v1327
    %1877 = vmatpush2.bf16.msra.mxu0 %v1326
    %1878 = vmatprep.subr.bf16.mxu0 %v1325
    %1879 = vmatpush2.bf16.msra.mxu0 %v1324
    %1880 = vmatprep.subr.bf16.mxu0 %v1323
    %1881 = vmatpush2.bf16.msra.mxu0 %v1322
    %1882 = vmatprep.subr.bf16.mxu0 %v1321
    %1883 = vmatpush2.bf16.msra.mxu0 %v1320
    %1884 = vmatprep.mubr.bf16.mxu0 %v145
    %1885 = vmatmul.mubr.bf16.gmra.mxu0 %v144
    %v1886 = vpop.f32.mrf.mxu0
    %v1887 = vadd.f32 %v1846, %v1886
    %v1888 = vpop.f32.mrf.mxu0
    %v1889 = vadd.f32 %v1848, %v1888
    %v1890 = vpop.f32.mrf.mxu0
    %v1891 = vpop.f32.mrf.mxu0
    %1892 = vdwg.mxu0
    %1893 = vmatprep.subr.bf16.mxu0 %v1351
    %1894 = vmatpush1.bf16.msra.mxu0 %v1350
    %1895 = vmatprep.subr.bf16.mxu0 %v1349
    %1896 = vmatpush1.bf16.msra.mxu0 %v1348
    %1897 = vmatprep.subr.bf16.mxu0 %v1347
    %1898 = vmatpush1.bf16.msra.mxu0 %v1346
    %1899 = vmatprep.subr.bf16.mxu0 %v1345
    %1900 = vmatpush1.bf16.msra.mxu0 %v1344
    %1901 = vmatprep.subr.bf16.mxu0 %v1343
    %1902 = vmatpush1.bf16.msra.mxu0 %v1342
    %1903 = vmatprep.subr.bf16.mxu0 %v1341
    %1904 = vmatpush1.bf16.msra.mxu0 %v1340
    %1905 = vmatprep.subr.bf16.mxu0 %v1339
    %1906 = vmatpush1.bf16.msra.mxu0 %v1338
    %1907 = vmatprep.subr.bf16.mxu0 %v1337
    %1908 = vmatpush1.bf16.msra.mxu0 %v1336
    %1909 = vmatprep.subr.bf16.mxu0 %v1367
    %1910 = vmatpush2.bf16.msra.mxu0 %v1366
    %1911 = vmatprep.subr.bf16.mxu0 %v1365
    %1912 = vmatpush2.bf16.msra.mxu0 %v1364
    %1913 = vmatprep.subr.bf16.mxu0 %v1363
    %1914 = vmatpush2.bf16.msra.mxu0 %v1362
    %1915 = vmatprep.subr.bf16.mxu0 %v1361
    %1916 = vmatpush2.bf16.msra.mxu0 %v1360
    %1917 = vmatprep.subr.bf16.mxu0 %v1359
    %1918 = vmatpush2.bf16.msra.mxu0 %v1358
    %1919 = vmatprep.subr.bf16.mxu0 %v1357
    %1920 = vmatpush2.bf16.msra.mxu0 %v1356
    %1921 = vmatprep.subr.bf16.mxu0 %v1355
    %1922 = vmatpush2.bf16.msra.mxu0 %v1354
    %1923 = vmatprep.subr.bf16.mxu0 %v1353
    %1924 = vmatpush2.bf16.msra.mxu0 %v1352
    %1925 = vmatprep.mubr.bf16.mxu0 %v147
    %1926 = vmatmul.mubr.bf16.gmra.mxu0 %v146
    %v1927 = vpop.f32.mrf.mxu0
    %v1928 = vadd.f32 %v1887, %v1927
    %v1929 = vpop.f32.mrf.mxu0
    %v1930 = vadd.f32 %v1889, %v1929
    %v1931 = vpop.f32.mrf.mxu0
    %v1932 = vpop.f32.mrf.mxu0
    %1933 = vdwg.mxu0
    %1934 = vmatprep.subr.bf16.mxu0 %v1383
    %1935 = vmatpush1.bf16.msra.mxu0 %v1382
    %1936 = vmatprep.subr.bf16.mxu0 %v1381
    %1937 = vmatpush1.bf16.msra.mxu0 %v1380
    %1938 = vmatprep.subr.bf16.mxu0 %v1379
    %1939 = vmatpush1.bf16.msra.mxu0 %v1378
    %1940 = vmatprep.subr.bf16.mxu0 %v1377
    %1941 = vmatpush1.bf16.msra.mxu0 %v1376
    %1942 = vmatprep.subr.bf16.mxu0 %v1375
    %1943 = vmatpush1.bf16.msra.mxu0 %v1374
    %1944 = vmatprep.subr.bf16.mxu0 %v1373
    %1945 = vmatpush1.bf16.msra.mxu0 %v1372
    %1946 = vmatprep.subr.bf16.mxu0 %v1371
    %1947 = vmatpush1.bf16.msra.mxu0 %v1370
    %1948 = vmatprep.subr.bf16.mxu0 %v1369
    %1949 = vmatpush1.bf16.msra.mxu0 %v1368
    %1950 = vmatprep.subr.bf16.mxu0 %v1399
    %1951 = vmatpush2.bf16.msra.mxu0 %v1398
    %1952 = vmatprep.subr.bf16.mxu0 %v1397
    %1953 = vmatpush2.bf16.msra.mxu0 %v1396
    %1954 = vmatprep.subr.bf16.mxu0 %v1395
    %1955 = vmatpush2.bf16.msra.mxu0 %v1394
    %1956 = vmatprep.subr.bf16.mxu0 %v1393
    %1957 = vmatpush2.bf16.msra.mxu0 %v1392
    %1958 = vmatprep.subr.bf16.mxu0 %v1391
    %1959 = vmatpush2.bf16.msra.mxu0 %v1390
    %1960 = vmatprep.subr.bf16.mxu0 %v1389
    %1961 = vmatpush2.bf16.msra.mxu0 %v1388
    %1962 = vmatprep.subr.bf16.mxu0 %v1387
    %1963 = vmatpush2.bf16.msra.mxu0 %v1386
    %1964 = vmatprep.subr.bf16.mxu0 %v1385
    %1965 = vmatpush2.bf16.msra.mxu0 %v1384
    %1966 = vmatprep.mubr.bf16.mxu0 %v149
    %1967 = vmatmul.mubr.bf16.gmra.mxu0 %v148
    %v1968 = vpop.f32.mrf.mxu0
    %v1969 = vadd.f32 %v1928, %v1968
    %v1970 = vpop.f32.mrf.mxu0
    %v1971 = vadd.f32 %v1930, %v1970
    %v1972 = vpop.f32.mrf.mxu0
    %v1973 = vpop.f32.mrf.mxu0
    %1974 = vdwg.mxu0
    %1975 = vmatprep.subr.bf16.mxu0 %v1415
    %1976 = vmatpush1.bf16.msra.mxu0 %v1414
    %1977 = vmatprep.subr.bf16.mxu0 %v1413
    %1978 = vmatpush1.bf16.msra.mxu0 %v1412
    %1979 = vmatprep.subr.bf16.mxu0 %v1411
    %1980 = vmatpush1.bf16.msra.mxu0 %v1410
    %1981 = vmatprep.subr.bf16.mxu0 %v1409
    %1982 = vmatpush1.bf16.msra.mxu0 %v1408
    %1983 = vmatprep.subr.bf16.mxu0 %v1407
    %1984 = vmatpush1.bf16.msra.mxu0 %v1406
    %1985 = vmatprep.subr.bf16.mxu0 %v1405
    %1986 = vmatpush1.bf16.msra.mxu0 %v1404
    %1987 = vmatprep.subr.bf16.mxu0 %v1403
    %1988 = vmatpush1.bf16.msra.mxu0 %v1402
    %1989 = vmatprep.subr.bf16.mxu0 %v1401
    %1990 = vmatpush1.bf16.msra.mxu0 %v1400
    %1991 = vmatprep.subr.bf16.mxu0 %v1431
    %1992 = vmatpush2.bf16.msra.mxu0 %v1430
    %1993 = vmatprep.subr.bf16.mxu0 %v1429
    %1994 = vmatpush2.bf16.msra.mxu0 %v1428
    %1995 = vmatprep.subr.bf16.mxu0 %v1427
    %1996 = vmatpush2.bf16.msra.mxu0 %v1426
    %1997 = vmatprep.subr.bf16.mxu0 %v1425
    %1998 = vmatpush2.bf16.msra.mxu0 %v1424
    %1999 = vmatprep.subr.bf16.mxu0 %v1423
    %2000 = vmatpush2.bf16.msra.mxu0 %v1422
    %2001 = vmatprep.subr.bf16.mxu0 %v1421
    %2002 = vmatpush2.bf16.msra.mxu0 %v1420
    %2003 = vmatprep.subr.bf16.mxu0 %v1419
    %2004 = vmatpush2.bf16.msra.mxu0 %v1418
    %2005 = vmatprep.subr.bf16.mxu0 %v1417
    %2006 = vmatpush2.bf16.msra.mxu0 %v1416
    %2007 = vmatprep.mubr.bf16.mxu0 %v151
    %2008 = vmatmul.mubr.bf16.gmra.mxu0 %v150
    %v2009 = vpop.f32.mrf.mxu0
    %v2010 = vadd.f32 %v1969, %v2009
    %v2011 = vpop.f32.mrf.mxu0
    %v2012 = vadd.f32 %v1971, %v2011
    %v2013 = vpop.f32.mrf.mxu0
    %v2014 = vpop.f32.mrf.mxu0
    %2015 = vdwg.mxu0
    %v2016 = vld [vmem:[#allocation7] sm:$0xff]
    %v2017 = vld [vmem:[#allocation7 + $0x8] sm:$0xff]
    %v2018 = vrot.slane %v2010, 4
    %v2019 = vadd.f32 %v2010, %v2018
    %v2020 = vrot.slane %v2019, 2
    %v2021 = vadd.f32 %v2019, %v2020
    %v2022 = vrot.slane %v2021, 1
    %v2023 = vadd.f32 %v2021, %v2022
    %v2024 = vrot.slane %v2012, 4
    %v2025 = vadd.f32 %v2012, %v2024
    %v2026 = vrot.slane %v2025, 2
    %v2027 = vadd.f32 %v2025, %v2026
    %v2028 = vrot.slane %v2027, 1
    %v2029 = vadd.f32 %v2027, %v2028
    %v2030 = vrcp.pop 8.0
    %v2031 = vmul.f32 %v2023, %v2030
    %v2032 = vmul.f32 %v2029, %v2030
    %v2033 = vsub.f32 %v2010, %v2031
    %v2034 = vsub.f32 %v2012, %v2032
    %v2035 = vmul.f32 %v2033, %v2033
    %v2036 = vmul.f32 %v2034, %v2034
    %v2037 = vrot.slane %v2035, 4
    %v2038 = vadd.f32 %v2035, %v2037
    %v2039 = vrot.slane %v2038, 2
    %v2040 = vadd.f32 %v2038, %v2039
    %v2041 = vrot.slane %v2040, 1
    %v2042 = vadd.f32 %v2040, %v2041
    %v2043 = vrot.slane %v2036, 4
    %v2044 = vadd.f32 %v2036, %v2043
    %v2045 = vrot.slane %v2044, 2
    %v2046 = vadd.f32 %v2044, %v2045
    %v2047 = vrot.slane %v2046, 1
    %v2048 = vadd.f32 %v2046, %v2047
    %v2049 = vmul.f32 %v2042, %v2030
    %v2050 = vmul.f32 %v2048, %v2030
    %v2051 = vadd.f32 %v2049, 1e-05
    %v2052 = vadd.f32 %v2050, 1e-05
    %v2053 = vrsqrt.pop %v2051
    %v2054 = vrsqrt.pop %v2052
    %v2055 = vmul.f32 %v2033, %v2053
    %v2056 = vmul.f32 %v2034, %v2054
    %v2057 = vlaneseq
    %v2058 = vshrl.u32 %v2057, 7
    %v2059 = vsub.s32 0, %v2058
    %v2060 = vrot.slane %v2016, %v2059
    %v2061 = vlaneseq
    %v2062 = vshrl.u32 %v2061, 7
    %v2063 = vsub.s32 0, %v2062
    %v2064 = vrot.slane %v2017, %v2063
    %v2065 = vmul.f32 %v2055, %v2060
    %v2066 = vmul.f32 %v2056, %v2064
    %v2067 = vlaneseq
    %v2068 = vshrl.u32 %v2067, 7
    %v2069 = vsub.s32 1, %v2068
    %v2070 = vrot.slane %v2016, %v2069
    %v2071 = vlaneseq
    %v2072 = vshrl.u32 %v2071, 7
    %v2073 = vsub.s32 1, %v2072
    %v2074 = vrot.slane %v2017, %v2073
    %v2075 = vadd.f32 %v2065, %v2070
    %v2076 = vadd.f32 %v2066, %v2074
    %v2077 = vmax.f32 %v2075, 0.0
    %v2078 = vmax.f32 %v2076, 0.0
    %v2079 = vpack.c.bf16 %v2077, %v2077
    %v2080 = vpack.c.bf16 %v2078, %v2078
    %v2081 = vld [vmem:[#allocation8] sm:$0xff]
    %v2082 = vld [vmem:[#allocation8 + $0x8] sm:$0xff]
    %v2083 = vld [vmem:[#allocation8 + $0x10] sm:$0xff]
    %v2084 = vld [vmem:[#allocation8 + $0x18] sm:$0xff]
    %v2085 = vld [vmem:[#allocation8 + $0x20] sm:$0xff]
    %v2086 = vld [vmem:[#allocation8 + $0x28] sm:$0xff]
    %v2087 = vld [vmem:[#allocation8 + $0x30] sm:$0xff]
    %v2088 = vld [vmem:[#allocation8 + $0x38] sm:$0xff]
    %v2089 = vld [vmem:[#allocation8 + $0x40] sm:$0xff]
    %v2090 = vld [vmem:[#allocation8 + $0x48] sm:$0xff]
    %v2091 = vld [vmem:[#allocation8 + $0x50] sm:$0xff]
    %v2092 = vld [vmem:[#allocation8 + $0x58] sm:$0xff]
    %v2093 = vld [vmem:[#allocation8 + $0x60] sm:$0xff]
    %v2094 = vld [vmem:[#allocation8 + $0x68] sm:$0xff]
    %v2095 = vld [vmem:[#allocation8 + $0x70] sm:$0xff]
    %v2096 = vld [vmem:[#allocation8 + $0x78] sm:$0xff]
    %v2097 = vld [vmem:[#allocation8 + $0x80] sm:$0xff]
    %v2098 = vld [vmem:[#allocation8 + $0x88] sm:$0xff]
    %v2099 = vld [vmem:[#allocation8 + $0x90] sm:$0xff]
    %v2100 = vld [vmem:[#allocation8 + $0x98] sm:$0xff]
    %v2101 = vld [vmem:[#allocation8 + $0xa0] sm:$0xff]
    %v2102 = vld [vmem:[#allocation8 + $0xa8] sm:$0xff]
    %v2103 = vld [vmem:[#allocation8 + $0xb0] sm:$0xff]
    %v2104 = vld [vmem:[#allocation8 + $0xb8] sm:$0xff]
    %v2105 = vld [vmem:[#allocation8 + $0xc0] sm:$0xff]
    %v2106 = vld [vmem:[#allocation8 + $0xc8] sm:$0xff]
    %v2107 = vld [vmem:[#allocation8 + $0xd0] sm:$0xff]
    %v2108 = vld [vmem:[#allocation8 + $0xd8] sm:$0xff]
    %v2109 = vld [vmem:[#allocation8 + $0xe0] sm:$0xff]
    %v2110 = vld [vmem:[#allocation8 + $0xe8] sm:$0xff]
    %v2111 = vld [vmem:[#allocation8 + $0xf0] sm:$0xff]
    %v2112 = vld [vmem:[#allocation8 + $0xf8] sm:$0xff]
    %v2113 = vlaneseq
    %v2114 = vshrl.u32 %v2113, 7
    %v2115 = vsub.s32 2, %v2114
    %v2116 = vrot.slane %v2016, %v2115
    %v2117 = vlaneseq
    %v2118 = vshrl.u32 %v2117, 7
    %v2119 = vsub.s32 2, %v2118
    %v2120 = vrot.slane %v2017, %v2119
    %v2153 = vunpack.c.l.b16 %v2081
    %v2154 = vunpack.c.h.b16 %v2081
    %v2155 = vunpack.c.l.b16 %v2082
    %v2156 = vunpack.c.h.b16 %v2082
    %v2157 = vunpack.c.l.b16 %v2083
    %v2158 = vunpack.c.h.b16 %v2083
    %v2159 = vunpack.c.l.b16 %v2084
    %v2160 = vunpack.c.h.b16 %v2084
    %v2161 = vunpack.c.l.b16 %v2085
    %v2162 = vunpack.c.h.b16 %v2085
    %v2163 = vunpack.c.l.b16 %v2086
    %v2164 = vunpack.c.h.b16 %v2086
    %v2165 = vunpack.c.l.b16 %v2087
    %v2166 = vunpack.c.h.b16 %v2087
    %v2167 = vunpack.c.l.b16 %v2088
    %v2168 = vunpack.c.h.b16 %v2088
    %v2169 = vunpack.c.l.b16 %v2089
    %v2170 = vunpack.c.h.b16 %v2089
    %v2171 = vunpack.c.l.b16 %v2090
    %v2172 = vunpack.c.h.b16 %v2090
    %v2173 = vunpack.c.l.b16 %v2091
    %v2174 = vunpack.c.h.b16 %v2091
    %v2175 = vunpack.c.l.b16 %v2092
    %v2176 = vunpack.c.h.b16 %v2092
    %v2177 = vunpack.c.l.b16 %v2093
    %v2178 = vunpack.c.h.b16 %v2093
    %v2179 = vunpack.c.l.b16 %v2094
    %v2180 = vunpack.c.h.b16 %v2094
    %v2181 = vunpack.c.l.b16 %v2095
    %v2182 = vunpack.c.h.b16 %v2095
    %v2183 = vunpack.c.l.b16 %v2096
    %v2184 = vunpack.c.h.b16 %v2096
    %v2185 = vunpack.c.l.b16 %v2097
    %v2186 = vunpack.c.h.b16 %v2097
    %v2187 = vunpack.c.l.b16 %v2098
    %v2188 = vunpack.c.h.b16 %v2098
    %v2189 = vunpack.c.l.b16 %v2099
    %v2190 = vunpack.c.h.b16 %v2099
    %v2191 = vunpack.c.l.b16 %v2100
    %v2192 = vunpack.c.h.b16 %v2100
    %v2193 = vunpack.c.l.b16 %v2101
    %v2194 = vunpack.c.h.b16 %v2101
    %v2195 = vunpack.c.l.b16 %v2102
    %v2196 = vunpack.c.h.b16 %v2102
    %v2197 = vunpack.c.l.b16 %v2103
    %v2198 = vunpack.c.h.b16 %v2103
    %v2199 = vunpack.c.l.b16 %v2104
    %v2200 = vunpack.c.h.b16 %v2104
    %v2201 = vunpack.c.l.b16 %v2105
    %v2202 = vunpack.c.h.b16 %v2105
    %v2203 = vunpack.c.l.b16 %v2106
    %v2204 = vunpack.c.h.b16 %v2106
    %v2205 = vunpack.c.l.b16 %v2107
    %v2206 = vunpack.c.h.b16 %v2107
    %v2207 = vunpack.c.l.b16 %v2108
    %v2208 = vunpack.c.h.b16 %v2108
    %v2209 = vunpack.c.l.b16 %v2109
    %v2210 = vunpack.c.h.b16 %v2109
    %v2211 = vunpack.c.l.b16 %v2110
    %v2212 = vunpack.c.h.b16 %v2110
    %v2213 = vunpack.c.l.b16 %v2111
    %v2214 = vunpack.c.h.b16 %v2111
    %v2215 = vunpack.c.l.b16 %v2112
    %v2216 = vunpack.c.h.b16 %v2112
    %v2217 = vpack.c.b16 %v2155, %v2153
    %v2218 = vpack.c.b16 %v2156, %v2154
    %v2219 = vpack.c.b16 %v2159, %v2157
    %v2220 = vpack.c.b16 %v2160, %v2158
    %v2221 = vpack.c.b16 %v2163, %v2161
    %v2222 = vpack.c.b16 %v2164, %v2162
    %v2223 = vpack.c.b16 %v2167, %v2165
    %v2224 = vpack.c.b16 %v2168, %v2166
    %v2225 = vpack.c.b16 %v2171, %v2169
    %v2226 = vpack.c.b16 %v2172, %v2170
    %v2227 = vpack.c.b16 %v2175, %v2173
    %v2228 = vpack.c.b16 %v2176, %v2174
    %v2229 = vpack.c.b16 %v2179, %v2177
    %v2230 = vpack.c.b16 %v2180, %v2178
    %v2231 = vpack.c.b16 %v2183, %v2181
    %v2232 = vpack.c.b16 %v2184, %v2182
    %v2233 = vpack.c.b16 %v2187, %v2185
    %v2234 = vpack.c.b16 %v2188, %v2186
    %v2235 = vpack.c.b16 %v2191, %v2189
    %v2236 = vpack.c.b16 %v2192, %v2190
    %v2237 = vpack.c.b16 %v2195, %v2193
    %v2238 = vpack.c.b16 %v2196, %v2194
    %v2239 = vpack.c.b16 %v2199, %v2197
    %v2240 = vpack.c.b16 %v2200, %v2198
    %v2241 = vpack.c.b16 %v2203, %v2201
    %v2242 = vpack.c.b16 %v2204, %v2202
    %v2243 = vpack.c.b16 %v2207, %v2205
    %v2244 = vpack.c.b16 %v2208, %v2206
    %v2245 = vpack.c.b16 %v2211, %v2209
    %v2246 = vpack.c.b16 %v2212, %v2210
    %v2247 = vpack.c.b16 %v2215, %v2213
    %v2248 = vpack.c.b16 %v2216, %v2214
    %2281 = vmatprep.subr.bf16.mxu0 %v2232
    %2282 = vmatpush1.bf16.msra.mxu0 %v2231
    %2283 = vmatprep.subr.bf16.mxu0 %v2230
    %2284 = vmatpush1.bf16.msra.mxu0 %v2229
    %2285 = vmatprep.subr.bf16.mxu0 %v2228
    %2286 = vmatpush1.bf16.msra.mxu0 %v2227
    %2287 = vmatprep.subr.bf16.mxu0 %v2226
    %2288 = vmatpush1.bf16.msra.mxu0 %v2225
    %2289 = vmatprep.subr.bf16.mxu0 %v2224
    %2290 = vmatpush1.bf16.msra.mxu0 %v2223
    %2291 = vmatprep.subr.bf16.mxu0 %v2222
    %2292 = vmatpush1.bf16.msra.mxu0 %v2221
    %2293 = vmatprep.subr.bf16.mxu0 %v2220
    %2294 = vmatpush1.bf16.msra.mxu0 %v2219
    %2295 = vmatprep.subr.bf16.mxu0 %v2218
    %2296 = vmatpush1.bf16.msra.mxu0 %v2217
    %2297 = vmatprep.subr.bf16.mxu0 %v2248
    %2298 = vmatpush2.bf16.msra.mxu0 %v2247
    %2299 = vmatprep.subr.bf16.mxu0 %v2246
    %2300 = vmatpush2.bf16.msra.mxu0 %v2245
    %2301 = vmatprep.subr.bf16.mxu0 %v2244
    %2302 = vmatpush2.bf16.msra.mxu0 %v2243
    %2303 = vmatprep.subr.bf16.mxu0 %v2242
    %2304 = vmatpush2.bf16.msra.mxu0 %v2241
    %2305 = vmatprep.subr.bf16.mxu0 %v2240
    %2306 = vmatpush2.bf16.msra.mxu0 %v2239
    %2307 = vmatprep.subr.bf16.mxu0 %v2238
    %2308 = vmatpush2.bf16.msra.mxu0 %v2237
    %2309 = vmatprep.subr.bf16.mxu0 %v2236
    %2310 = vmatpush2.bf16.msra.mxu0 %v2235
    %2311 = vmatprep.subr.bf16.mxu0 %v2234
    %2312 = vmatpush2.bf16.msra.mxu0 %v2233
    %2313 = vmatprep.mubr.bf16.mxu0 %v2080
    %2314 = vmatmul.mubr.bf16.gmra.mxu0 %v2079
    %v2315 = vpop.f32.mrf.mxu0
    %v2316 = vadd.f32 %v2116, %v2315
    %v2317 = vpop.f32.mrf.mxu0
    %v2318 = vadd.f32 %v2120, %v2317
    %v2319 = vpop.f32.mrf.mxu0
    %v2320 = vpop.f32.mrf.mxu0
    %2321 = vdwg.mxu0
    %v2322 = vrot.slane %v2316, 4
    %v2323 = vadd.f32 %v2316, %v2322
    %v2324 = vrot.slane %v2323, 2
    %v2325 = vadd.f32 %v2323, %v2324
    %v2326 = vrot.slane %v2325, 1
    %v2327 = vadd.f32 %v2325, %v2326
    %v2328 = vrot.slane %v2318, 4
    %v2329 = vadd.f32 %v2318, %v2328
    %v2330 = vrot.slane %v2329, 2
    %v2331 = vadd.f32 %v2329, %v2330
    %v2332 = vrot.slane %v2331, 1
    %v2333 = vadd.f32 %v2331, %v2332
    %v2334 = vmul.f32 %v2327, %v2030
    %v2335 = vmul.f32 %v2333, %v2030
    %v2336 = vsub.f32 %v2316, %v2334
    %v2337 = vsub.f32 %v2318, %v2335
    %v2338 = vmul.f32 %v2336, %v2336
    %v2339 = vmul.f32 %v2337, %v2337
    %v2340 = vrot.slane %v2338, 4
    %v2341 = vadd.f32 %v2338, %v2340
    %v2342 = vrot.slane %v2341, 2
    %v2343 = vadd.f32 %v2341, %v2342
    %v2344 = vrot.slane %v2343, 1
    %v2345 = vadd.f32 %v2343, %v2344
    %v2346 = vrot.slane %v2339, 4
    %v2347 = vadd.f32 %v2339, %v2346
    %v2348 = vrot.slane %v2347, 2
    %v2349 = vadd.f32 %v2347, %v2348
    %v2350 = vrot.slane %v2349, 1
    %v2351 = vadd.f32 %v2349, %v2350
    %v2352 = vmul.f32 %v2345, %v2030
    %v2353 = vmul.f32 %v2351, %v2030
    %v2354 = vadd.f32 %v2352, 1e-05
    %v2355 = vadd.f32 %v2353, 1e-05
    %v2356 = vrsqrt.pop %v2354
    %v2357 = vrsqrt.pop %v2355
    %v2358 = vmul.f32 %v2336, %v2356
    %v2359 = vmul.f32 %v2337, %v2357
    %v2360 = vlaneseq
    %v2361 = vshrl.u32 %v2360, 7
    %v2362 = vsub.s32 3, %v2361
    %v2363 = vrot.slane %v2016, %v2362
    %v2364 = vlaneseq
    %v2365 = vshrl.u32 %v2364, 7
    %v2366 = vsub.s32 3, %v2365
    %v2367 = vrot.slane %v2017, %v2366
    %v2368 = vmul.f32 %v2358, %v2363
    %v2369 = vmul.f32 %v2359, %v2367
    %v2370 = vlaneseq
    %v2371 = vshrl.u32 %v2370, 7
    %v2372 = vsub.s32 4, %v2371
    %v2373 = vrot.slane %v2016, %v2372
    %v2374 = vlaneseq
    %v2375 = vshrl.u32 %v2374, 7
    %v2376 = vsub.s32 4, %v2375
    %v2377 = vrot.slane %v2017, %v2376
    %v2378 = vadd.f32 %v2368, %v2373
    %v2379 = vadd.f32 %v2369, %v2377
    %v2380 = vmul.f32 %v2378, %v2378
    %v2381 = vmul.f32 %v2379, %v2379
    %v2382 = vadd.f32 %v2380, %v2381
    %2383 = vadd.xlane.f32.xlu0 %v2382
    %v2384 = vpop.xlane.xlu0 %2383
    %v2385 = vmax.f32 %v2384, 1e-24
    %v2386 = vrsqrt.pop %v2385
    %v2387 = vmul.f32 %v2378, %v2386
    %v2388 = vmul.f32 %v2379, %v2386
    %v2389 = vlaneseq
    %v2390 = vshrl.u32 %v2389, 7
    %v2391 = vrot.slane %v2387, 4
    %v2392 = vrot.slane %v2388, 4
    %v2393 = vsub.f32 %v2387, %v2391
    %v2394 = vsub.f32 %v2388, %v2392
    %v2395 = vmul.f32 %v2393, %v2393
    %v2396 = vmul.f32 %v2394, %v2394
    %v2397 = vadd.f32 %v2395, %v2396
    %2398 = vadd.xlane.f32.xlu0 %v2397
    %v2399 = vpop.xlane.xlu0 %2398
    %v2400 = vrsqrt.pop %v2399
    %v2401 = vmul.f32 %v2399, %v2400
    %vm2402 = vcmp.eq.f32.partialorder %v2399, inf
    %v2403 = vsel %vm2402, %v2399, %v2401
    %vm2404 = vcmp.eq.f32.partialorder %v2399, 0.0
    %v2405 = vand.u32 %v2399, 2147483648
    %v2406 = vsel %vm2404, %v2405, %v2403
    %vm2407 = vcmp.ge.s32.totalorder %v2390, 0
    %vm2408 = vcmp.lt.s32.totalorder %v2390, 4
    %vm2409 = vmand %vm2407, %vm2408
    %v2410 = vsel %vm2409, %v2406, 0.0
    %vm2411 = vcmask 7168
    %v2412 = vsel %vm2411, %v2410, 0.0
    %2413 = vadd.xlane.f32.xlu0 %v2412
    %v2414 = vpop.xlane.xlu0 %2413
    %v2415 = vrot.slane %v2414, 4
    %v2416 = vadd.f32 %v2414, %v2415
    %v2417 = vrot.slane %v2416, 2
    %v2418 = vadd.f32 %v2416, %v2417
    %v2419 = vrot.slane %v2418, 1
    %v2420 = vadd.f32 %v2418, %v2419
    %s2421 = vtos %v2420
    %v2422 = vrcp.pop 4.0
    %s2423 = vtos %v2422
    %s2424 = smul.f32 %s2421, %s2423
    %s2425 = sadd.f32 %s2424, 0.0
    %s2426 = scalar_lea.smem [#allocation10], 0
    %2427 = sst [smem:[%s2426]] %s2425
    // Predicated region
    $region34: #{tpu_custom_call.1} parent=1 // pred_check
      _
    $region35: #{tpu_custom_call.1} parent=1 // pred_check_branch
      %2429 = sbr.rel (0) target = $region37
    $region36: #{tpu_custom_call.1} parent=1 // pred_region
      %s2431 = ssub.s32 16, 16
      %2432 = vsyncadd [#allocation4], %s2431
      %2435 = dma.smem_to_hbm [#allocation10], 16, %s4, [#allocation4]
    $region37: #{tpu_custom_call.1} parent=1 // pred_fallthru
      _
    // Predicated region
    $region38: #{tpu_custom_call.1} parent=1 // pred_check
      _
    $region39: #{tpu_custom_call.1} parent=1 // pred_check_branch
      %2437 = sbr.rel (0) target = $region41
    $region40: #{tpu_custom_call.1} parent=1 // pred_region
      %2438 = dma.done [#allocation4], 16
    $region41: #{tpu_custom_call.1} parent=1 // pred_fallthru
      _
    %2439 = sfence
    %2440 = vsyncpa [#allocation3], 1
    %2441 = vsyncpa [#allocation6], 1
    %2442 = vsyncpa [#allocation9], 1
    %2443 = vsyncpa [#allocation4], 1

</llo_original>
